<compile_context>
chip_gen: v6e
topology: v6e:2x2x1
jax: 0.10.0
libtpu: 0.0.40
codegen_flags: <defaults>
</compile_context>

<pallas_src>
import jax
import jax.numpy as jnp
from jax.experimental import pallas as pl
from jax.experimental.pallas import tpu as pltpu

NB_FEATURES = 2048
L = 256
D = 256
H2 = 128
H3 = 64
A_PAD = 128   # lane-dense width for the attention-map output (>= N)


def gated_attention_kernel(
    x_ref,                      # (TB, N, F)  f32 (cast to bf16 in-body)
    w1_ref, b1_ref,             # (F, L) bf16, (1, L) f32
    wv_ref, bv_ref,             # (L, D) bf16, (1, D) f32
    wu_ref, bu_ref,             # (L, D) bf16, (1, D) f32
    wa_ref, ba_ref,             # (1, D) f32, (1, 1) f32
    pooled_ref,                 # (TB, L)      f32
    a_ref,                      # (TB, A_PAD)  f32, first N cols valid
):
    TB, N, F = x_ref.shape
    Ld = w1_ref.shape[1]

    # fc1 for all TB*N instances at once: big-M bf16 MXU matmul, f32 acc.
    # x arrives as f32 straight from HBM; cast here (no extra HBM pass).
    x2 = x_ref[...].reshape(TB * N, F).astype(jnp.bfloat16)
    h = jnp.dot(x2, w1_ref[...], preferred_element_type=jnp.float32) + b1_ref[...]

    # gated attention branches: bf16 MXU matmuls with f32 accumulation.
    h_bf = h.astype(jnp.bfloat16)
    v = jnp.tanh(
        jnp.dot(h_bf, wv_ref[...], preferred_element_type=jnp.float32) + bv_ref[...]
    )
    u = jax.nn.sigmoid(
        jnp.dot(h_bf, wu_ref[...], preferred_element_type=jnp.float32) + bu_ref[...]
    )

    # attention logits: VPU multiply + lane reduction, kept in row-major
    # (TB*N, 1) column form so no relayout is needed before the pooling step.
    logits_col = jnp.sum(v * u * wa_ref[...], axis=-1, keepdims=True) + ba_ref[...]
    logits3 = logits_col.reshape(TB, N, 1)                      # (TB, N, 1)

    # per-bag softmax over the N sublane groups (numerically stable; EUP
    # approximate reciprocal for the denominator).
    m = jnp.max(logits3, axis=1, keepdims=True)                 # (TB, 1, 1)
    e = jnp.exp(logits3 - m)                                    # (TB, N, 1)
    denom = jnp.sum(e, axis=1, keepdims=True)                   # (TB, 1, 1)
    attn3 = e * pl.reciprocal(denom, approx=True)               # (TB, N, 1)

    # attention-weighted pooling over the fc1 output (f32):
    #   pooled[t] = sum_n attn[t, n] * h[t, n, :]
    h3 = h.reshape(TB, N, Ld)
    pooled_ref[...] = jnp.sum(attn3 * h3, axis=1)               # (TB, L)

    # attention map: one relayout (sublanes -> lanes), stored into a lane-dense
    # (TB, A_PAD) slab so the HBM writeback uses full-width unmasked stores.
    a_ref[...] = jnp.zeros_like(a_ref)
    a_ref[:, :N] = attn3.reshape(TB, N)


def gated_attention_forward(x, params, *, tb=128):
    """x: (B, N, NB_FEATURES) float32.

    Returns (Y_prob (B,1), Y_hat (B,1), A (B,1,N)) matching the PyTorch module.
    `tb` is the bags-per-grid-step tile (128 for v6e/v7x, ~64 suits v5e).
    """
    B, N, F = x.shape
    assert F == NB_FEATURES and N <= A_PAD

    (w1, b1, wv, bv, wu, bu, wa, ba, w2, b2, w3, b3, wc, bc) = params

    # No batch padding: grid over ceil(B / TB); the last partial block's extra
    # rows are dropped by the masked output writeback and never read back.
    TB = min(tb, B)
    grid = (pl.cdiv(B, TB),)

    # Only the (small, reused) MXU weight operands are pre-cast to bf16; x
    # stays f32 and is cast inside the kernel body.
    w1_b = w1.astype(jnp.bfloat16)
    wv_b = wv.astype(jnp.bfloat16)
    wu_b = wu.astype(jnp.bfloat16)

    rep = lambda a: pl.BlockSpec(a.shape, lambda b: (0,) * a.ndim)

    grid_spec = pltpu.PrefetchScalarGridSpec(
        num_scalar_prefetch=0,
        grid=grid,
        in_specs=[
            pl.BlockSpec((TB, N, F), lambda b: (b, 0, 0)),      # x: TB bags/step
            rep(w1_b), rep(b1),
            rep(wv_b), rep(bv),
            rep(wu_b), rep(bu),
            rep(wa), rep(ba),
        ],
        out_specs=[
            pl.BlockSpec((TB, L), lambda b: (b, 0)),            # pooled
            pl.BlockSpec((TB, A_PAD), lambda b: (b, 0)),        # attention map
        ],
    )

    cost_estimate = pl.CostEstimate(
        flops=int(2 * B * N * F * L + 2 * (2 * B * N * L * D)
                  + 2 * B * N * D + 2 * B * N * L),
        transcendentals=int(2 * B * N * D + B * N + B),
        bytes_accessed=int(B * N * F * 4 + (F * L + 2 * L * D) * 2
                           + (L + 3 * D + 1) * 4 + B * (L + A_PAD) * 4),
    )

    pooled, attn_pad = pl.pallas_call(
        gated_attention_kernel,
        out_shape=(
            jax.ShapeDtypeStruct((B, L), jnp.float32),
            jax.ShapeDtypeStruct((B, A_PAD), jnp.float32),
        ),
        grid_spec=grid_spec,
        compiler_params=pltpu.CompilerParams(
            dimension_semantics=("parallel",),
            vmem_limit_bytes=48 * 1024 * 1024,   # headroom for TB=128 on v7x's 64 MiB VMEM
        ),
        cost_estimate=cost_estimate,
    )(x, w1_b, b1, wv_b, bv, wu_b, bu, wa, ba)

    attn = attn_pad[:, :N]                           # drop lane padding

    # tiny tail MLP + threshold in plain XLA (M=1-per-bag matmuls batched over
    # B are already near-optimal there; fusing only matters at very small B).
    M = jnp.tanh(pooled @ w2 + b2)
    M = jnp.tanh(M @ w3 + b3)
    Y_prob = jax.nn.sigmoid(M @ wc + bc)             # (B, 1)
    Y_hat = (Y_prob >= 0.5).astype(jnp.float32)      # (B, 1)
    A = attn[:, None, :]                             # (B, 1, N)
    return Y_prob, Y_hat, A


def init_params(key):
    """Deterministic synthetic parameter init (shapes mirror the PyTorch module)."""
    ks = jax.random.split(key, 7)

    def lin(k, fan_in, fan_out, w_shape=None):
        bound = 1.0 / jnp.sqrt(fan_in)
        kw, kb = jax.random.split(k)
        w_shape = (fan_in, fan_out) if w_shape is None else w_shape
        w = jax.random.uniform(kw, w_shape, jnp.float32, -bound, bound)
        b = jax.random.uniform(kb, (1, fan_out), jnp.float32, -bound, bound)
        return w, b

    w1, b1 = lin(ks[0], NB_FEATURES, L)
    wv, bv = lin(ks[1], L, D)
    wu, bu = lin(ks[2], L, D)
    wa, ba = lin(ks[3], D, 1, w_shape=(1, D))   # attention_weights, stored as a row
    w2, b2 = lin(ks[4], L, H2)
    w3, b3 = lin(ks[5], H2, H3)
    wc, bc = lin(ks[6], H3, 1)
    return (w1, b1, wv, bv, wu, bu, wa, ba, w2, b2, w3, b3, wc, bc)


def reference_forward(x, params):
    """Pure-JAX reference mirroring the PyTorch forward, with the same MXU
    numerics as the kernel (bf16 inputs / f32 accumulation for fc1 and the
    attention_V / attention_U matmuls)."""
    (w1, b1, wv, bv, wu, bu, wa, ba, w2, b2, w3, b3, wc, bc) = params
    h = jnp.einsum(
        "bnf,fl->bnl", x.astype(jnp.bfloat16), w1.astype(jnp.bfloat16),
        preferred_element_type=jnp.float32,
    ) + b1                                                    # (B, N, L)
    h_bf = h.astype(jnp.bfloat16)
    V = jnp.tanh(jnp.einsum("bnl,ld->bnd", h_bf, wv.astype(jnp.bfloat16),
                            preferred_element_type=jnp.float32) + bv)
    U = jax.nn.sigmoid(jnp.einsum("bnl,ld->bnd", h_bf, wu.astype(jnp.bfloat16),
                                  preferred_element_type=jnp.float32) + bu)
    A = jnp.sum((V * U) * wa, axis=-1, keepdims=True) + ba    # (B, N, 1)
    A = jnp.swapaxes(A, 1, 2)                                 # (B, 1, N)
    A = jax.nn.softmax(A, axis=2)
    M = jnp.matmul(A, h)[:, 0, :]                             # (B, L)
    M = jnp.tanh(M @ w2 + b2)
    M = jnp.tanh(M @ w3 + b3)
    Y_prob = jax.nn.sigmoid(M @ wc + bc)                      # (B, 1)
    Y_hat = (Y_prob >= 0.5).astype(jnp.float32)
    return Y_prob, Y_hat, A


if __name__ == "__main__":
    key = jax.random.PRNGKey(0)
    kx, kp = jax.random.split(key)

    B, N = 2, 8
    x = jax.random.normal(kx, (B, N, NB_FEATURES), jnp.float32)
    params = init_params(kp)

    fwd = jax.jit(gated_attention_forward)
    y_prob, y_hat, A = fwd(x, params)
    jax.block_until_ready((y_prob, y_hat, A))

    # Sanity check against the pure-JAX reference.
    yp_ref, yh_ref, A_ref = reference_forward(x, params)
    assert y_prob.shape == (B, 1) and y_hat.shape == (B, 1) and A.shape == (B, 1, N)
    assert jnp.allclose(y_prob, yp_ref, atol=2e-3, rtol=2e-3)
    assert jnp.allclose(A, A_ref, atol=2e-3, rtol=2e-3)
    # Y_hat: only compare away from the 0.5 decision boundary (numerics there
    # can legitimately flip the thresholded bit).
    safe = jnp.abs(yp_ref - 0.5) > 1e-3
    assert bool(jnp.all(jnp.where(safe, y_hat == yh_ref, True)))

    print("KERNEL_OK")
</pallas_src>

<mosaic_0001>
module attributes {stable_mosaic.version = 11 : i64} {
  func.func @gated_attention_kernel(%arg0: i32, %arg1: memref<2x8x2048xf32, #tpu.memory_space<vmem>>, %arg2: memref<2048x256xbf16, #tpu.memory_space<vmem>>, %arg3: memref<1x256xf32, #tpu.memory_space<vmem>>, %arg4: memref<256x256xbf16, #tpu.memory_space<vmem>>, %arg5: memref<1x256xf32, #tpu.memory_space<vmem>>, %arg6: memref<256x256xbf16, #tpu.memory_space<vmem>>, %arg7: memref<1x256xf32, #tpu.memory_space<vmem>>, %arg8: memref<1x256xf32, #tpu.memory_space<vmem>>, %arg9: memref<1x1xf32, #tpu.memory_space<vmem>>, %arg10: memref<2x256xf32, #tpu.memory_space<vmem>>, %arg11: memref<2x128xf32, #tpu.memory_space<vmem>>) attributes {dimension_semantics = [#tpu.dimension_semantics<parallel>], iteration_bounds = array<i64: 1>, scalar_prefetch = 0 : i64, scratch_operands = 0 : i64, tpu.core_type = #tpu.core_type<tc>, window_params = [{transform_indices = @transform_0, window_bounds = array<i64: 2, 8, 2048>}, {pipeline_mode = #tpu.pipeline_mode<synchronous>, transform_indices = @transform_1, window_bounds = array<i64: 2048, 256>}, {pipeline_mode = #tpu.pipeline_mode<synchronous>, transform_indices = @transform_2, window_bounds = array<i64: 1, 256>}, {pipeline_mode = #tpu.pipeline_mode<synchronous>, transform_indices = @transform_3, window_bounds = array<i64: 256, 256>}, {pipeline_mode = #tpu.pipeline_mode<synchronous>, transform_indices = @transform_4, window_bounds = array<i64: 1, 256>}, {pipeline_mode = #tpu.pipeline_mode<synchronous>, transform_indices = @transform_5, window_bounds = array<i64: 256, 256>}, {pipeline_mode = #tpu.pipeline_mode<synchronous>, transform_indices = @transform_6, window_bounds = array<i64: 1, 256>}, {pipeline_mode = #tpu.pipeline_mode<synchronous>, transform_indices = @transform_7, window_bounds = array<i64: 1, 256>}, {pipeline_mode = #tpu.pipeline_mode<synchronous>, transform_indices = @transform_8, window_bounds = array<i64: 1, 1>}, {transform_indices = @transform_9, window_bounds = array<i64: 2, 256>}, {transform_indices = @transform_10, window_bounds = array<i64: 2, 128>}]} {
    %c0 = arith.constant 0 : index
    %c0_0 = arith.constant 0 : index
    %c0_1 = arith.constant 0 : index
    %0 = vector.load %arg1[%c0, %c0_0, %c0_1] : memref<2x8x2048xf32, #tpu.memory_space<vmem>>, vector<2x8x2048xf32>
    %1 = vector.shape_cast %0 : vector<2x8x2048xf32> to vector<16x2048xf32>
    %2 = arith.truncf %1 : vector<16x2048xf32> to vector<16x2048xbf16>
    %c0_2 = arith.constant 0 : index
    %c0_3 = arith.constant 0 : index
    %3 = vector.load %arg2[%c0_2, %c0_3] : memref<2048x256xbf16, #tpu.memory_space<vmem>>, vector<2048x256xbf16>
    %cst = arith.constant dense<0.000000e+00> : vector<16x256xf32>
    %4 = tpu.matmul %2, %3, %cst {dimension_numbers = #tpu.dot_dimension_numbers<[1], [0], [0], [1], [0, 0, 1, 1], [], []>} : vector<16x2048xbf16>, vector<2048x256xbf16>, vector<16x256xf32> -> vector<16x256xf32>
    %c0_4 = arith.constant 0 : index
    %c0_5 = arith.constant 0 : index
    %5 = vector.load %arg3[%c0_4, %c0_5] : memref<1x256xf32, #tpu.memory_space<vmem>>, vector<1x256xf32>
    %6 = vector.broadcast %5 : vector<1x256xf32> to vector<16x256xf32>
    %7 = arith.addf %4, %6 : vector<16x256xf32>
    %8 = arith.truncf %7 : vector<16x256xf32> to vector<16x256xbf16>
    %c0_6 = arith.constant 0 : index
    %c0_7 = arith.constant 0 : index
    %9 = vector.load %arg4[%c0_6, %c0_7] : memref<256x256xbf16, #tpu.memory_space<vmem>>, vector<256x256xbf16>
    %cst_8 = arith.constant dense<0.000000e+00> : vector<16x256xf32>
    %10 = tpu.matmul %8, %9, %cst_8 {dimension_numbers = #tpu.dot_dimension_numbers<[1], [0], [0], [1], [0, 0, 1, 1], [], []>} : vector<16x256xbf16>, vector<256x256xbf16>, vector<16x256xf32> -> vector<16x256xf32>
    %c0_9 = arith.constant 0 : index
    %c0_10 = arith.constant 0 : index
    %11 = vector.load %arg5[%c0_9, %c0_10] : memref<1x256xf32, #tpu.memory_space<vmem>>, vector<1x256xf32>
    %12 = vector.broadcast %11 : vector<1x256xf32> to vector<16x256xf32>
    %13 = arith.addf %10, %12 : vector<16x256xf32>
    %14 = math.tanh %13 : vector<16x256xf32>
    %c0_11 = arith.constant 0 : index
    %c0_12 = arith.constant 0 : index
    %15 = vector.load %arg6[%c0_11, %c0_12] : memref<256x256xbf16, #tpu.memory_space<vmem>>, vector<256x256xbf16>
    %cst_13 = arith.constant dense<0.000000e+00> : vector<16x256xf32>
    %16 = tpu.matmul %8, %15, %cst_13 {dimension_numbers = #tpu.dot_dimension_numbers<[1], [0], [0], [1], [0, 0, 1, 1], [], []>} : vector<16x256xbf16>, vector<256x256xbf16>, vector<16x256xf32> -> vector<16x256xf32>
    %c0_14 = arith.constant 0 : index
    %c0_15 = arith.constant 0 : index
    %17 = vector.load %arg7[%c0_14, %c0_15] : memref<1x256xf32, #tpu.memory_space<vmem>>, vector<1x256xf32>
    %18 = vector.broadcast %17 : vector<1x256xf32> to vector<16x256xf32>
    %19 = arith.addf %16, %18 : vector<16x256xf32>
    %20 = arith.negf %19 : vector<16x256xf32>
    %21 = math.exp %20 : vector<16x256xf32>
    %cst_16 = arith.constant 1.000000e+00 : f32
    %22 = vector.broadcast %cst_16 : f32 to vector<16x256xf32>
    %23 = arith.addf %22, %21 : vector<16x256xf32>
    %24 = arith.divf %22, %23 : vector<16x256xf32>
    %25 = arith.mulf %14, %24 : vector<16x256xf32>
    %c0_17 = arith.constant 0 : index
    %c0_18 = arith.constant 0 : index
    %26 = vector.load %arg8[%c0_17, %c0_18] : memref<1x256xf32, #tpu.memory_space<vmem>>, vector<1x256xf32>
    %27 = vector.broadcast %26 : vector<1x256xf32> to vector<16x256xf32>
    %28 = arith.mulf %25, %27 : vector<16x256xf32>
    %cst_19 = arith.constant dense<0.000000e+00> : vector<16xf32>
    %29 = vector.multi_reduction <add>, %28, %cst_19 [1] : vector<16x256xf32> to vector<16xf32>
    %30 = vector.shape_cast %29 : vector<16xf32> to vector<16x1xf32>
    %c0_20 = arith.constant 0 : index
    %c0_21 = arith.constant 0 : index
    %31 = vector.load %arg9[%c0_20, %c0_21] : memref<1x1xf32, #tpu.memory_space<vmem>>, vector<1x1xf32>
    %32 = vector.broadcast %31 : vector<1x1xf32> to vector<16x1xf32>
    %33 = arith.addf %30, %32 : vector<16x1xf32>
    %34 = vector.shape_cast %33 : vector<16x1xf32> to vector<2x8x1xf32>
    %cst_22 = arith.constant dense<0xFF800000> : vector<2x1xf32>
    %35 = vector.multi_reduction <maximumf>, %34, %cst_22 [1] : vector<2x8x1xf32> to vector<2x1xf32>
    %36 = vector.shape_cast %35 : vector<2x1xf32> to vector<2x1x1xf32>
    %37 = vector.broadcast %36 : vector<2x1x1xf32> to vector<2x8x1xf32>
    %38 = arith.subf %34, %37 : vector<2x8x1xf32>
    %39 = math.exp %38 : vector<2x8x1xf32>
    %cst_23 = arith.constant dense<0.000000e+00> : vector<2x1xf32>
    %40 = vector.multi_reduction <add>, %39, %cst_23 [1] : vector<2x8x1xf32> to vector<2x1xf32>
    %41 = vector.shape_cast %40 : vector<2x1xf32> to vector<2x1x1xf32>
    %42 = tpu.reciprocal %41 {approx = true} : vector<2x1x1xf32> -> vector<2x1x1xf32>
    %43 = vector.broadcast %42 : vector<2x1x1xf32> to vector<2x8x1xf32>
    %44 = arith.mulf %39, %43 : vector<2x8x1xf32>
    %45 = vector.shape_cast %7 : vector<16x256xf32> to vector<2x8x256xf32>
    %46 = vector.broadcast %44 : vector<2x8x1xf32> to vector<2x8x256xf32>
    %47 = arith.mulf %46, %45 : vector<2x8x256xf32>
    %cst_24 = arith.constant dense<0.000000e+00> : vector<2x256xf32>
    %48 = vector.multi_reduction <add>, %47, %cst_24 [1] : vector<2x8x256xf32> to vector<2x256xf32>
    %c0_25 = arith.constant 0 : index
    %c0_26 = arith.constant 0 : index
    %49 = vector.load %arg10[%c0_25, %c0_26] : memref<2x256xf32, #tpu.memory_space<vmem>>, vector<2x256xf32>
    tpu.vector_store %arg10[%c0_25, %c0_26], %48 {strides = array<i32>} : memref<2x256xf32, #tpu.memory_space<vmem>>, vector<2x256xf32>,
    %cst_27 = arith.constant 0.000000e+00 : f32
    %50 = vector.broadcast %cst_27 : f32 to vector<2x128xf32>
    %c0_28 = arith.constant 0 : index
    %c0_29 = arith.constant 0 : index
    %51 = vector.load %arg11[%c0_28, %c0_29] : memref<2x128xf32, #tpu.memory_space<vmem>>, vector<2x128xf32>
    tpu.vector_store %arg11[%c0_28, %c0_29], %50 {strides = array<i32>} : memref<2x128xf32, #tpu.memory_space<vmem>>, vector<2x128xf32>,
    %52 = vector.shape_cast %44 : vector<2x8x1xf32> to vector<2x8xf32>
    %c0_30 = arith.constant 0 : index
    %c0_31 = arith.constant 0 : index
    %53 = vector.load %arg11[%c0_30, %c0_31] : memref<2x128xf32, #tpu.memory_space<vmem>>, vector<2x8xf32>
    tpu.vector_store %arg11[%c0_30, %c0_31], %52 {strides = array<i32>} : memref<2x128xf32, #tpu.memory_space<vmem>>, vector<2x8xf32>,
    return
  }
  func.func @transform_0(%arg0: i32) -> (i32, i32, i32) {
    %c0_i32 = arith.constant 0 : i32
    %c0_i32_0 = arith.constant 0 : i32
    %c0_i32_1 = arith.constant 0 : i32
    return %arg0, %c0_i32, %c0_i32_0 : i32, i32, i32
  }
  func.func @transform_1(%arg0: i32) -> (i32, i32) {
    %c0_i32 = arith.constant 0 : i32
    %c0_i32_0 = arith.constant 0 : i32
    %c0_i32_1 = arith.constant 0 : i32
    return %c0_i32, %c0_i32_0 : i32, i32
  }
  func.func @transform_2(%arg0: i32) -> (i32, i32) {
    %c0_i32 = arith.constant 0 : i32
    %c0_i32_0 = arith.constant 0 : i32
    %c0_i32_1 = arith.constant 0 : i32
    return %c0_i32, %c0_i32_0 : i32, i32
  }
  func.func @transform_3(%arg0: i32) -> (i32, i32) {
    %c0_i32 = arith.constant 0 : i32
    %c0_i32_0 = arith.constant 0 : i32
    %c0_i32_1 = arith.constant 0 : i32
    return %c0_i32, %c0_i32_0 : i32, i32
  }
  func.func @transform_4(%arg0: i32) -> (i32, i32) {
    %c0_i32 = arith.constant 0 : i32
    %c0_i32_0 = arith.constant 0 : i32
    %c0_i32_1 = arith.constant 0 : i32
    return %c0_i32, %c0_i32_0 : i32, i32
  }
  func.func @transform_5(%arg0: i32) -> (i32, i32) {
    %c0_i32 = arith.constant 0 : i32
    %c0_i32_0 = arith.constant 0 : i32
    %c0_i32_1 = arith.constant 0 : i32
    return %c0_i32, %c0_i32_0 : i32, i32
  }
  func.func @transform_6(%arg0: i32) -> (i32, i32) {
    %c0_i32 = arith.constant 0 : i32
    %c0_i32_0 = arith.constant 0 : i32
    %c0_i32_1 = arith.constant 0 : i32
    return %c0_i32, %c0_i32_0 : i32, i32
  }
  func.func @transform_7(%arg0: i32) -> (i32, i32) {
    %c0_i32 = arith.constant 0 : i32
    %c0_i32_0 = arith.constant 0 : i32
    %c0_i32_1 = arith.constant 0 : i32
    return %c0_i32, %c0_i32_0 : i32, i32
  }
  func.func @transform_8(%arg0: i32) -> (i32, i32) {
    %c0_i32 = arith.constant 0 : i32
    %c0_i32_0 = arith.constant 0 : i32
    %c0_i32_1 = arith.constant 0 : i32
    return %c0_i32, %c0_i32_0 : i32, i32
  }
  func.func @transform_9(%arg0: i32) -> (i32, i32) {
    %c0_i32 = arith.constant 0 : i32
    %c0_i32_0 = arith.constant 0 : i32
    return %arg0, %c0_i32 : i32, i32
  }
  func.func @transform_10(%arg0: i32) -> (i32, i32) {
    %c0_i32 = arith.constant 0 : i32
    %c0_i32_0 = arith.constant 0 : i32
    return %arg0, %c0_i32 : i32, i32
  }
}

</mosaic_0001>

<llo_original>
// kernel: gated_attention_forward.1
$region0: #{gated_attention_forward.1}
  #allocation0 [shape = 'u32[]', space=smem, size = 0x4, offset = 0x4, fixed_abs, tag = 'smem constant byte address 0x4 - core index']
  #allocation1 [shape = 'u32[144,128]{1,0:T(1,128)}', space=vmem, size = 0x12000, scoped, tag = 'internal scratch']
  #allocation2 [shape = 'f32[1,1]{1,0:T(1,128)S(1)}', space=vmem, size = 0x200, scoped, tag = 'scoped memory for gated_attention_forward.1']
  %s0 = inlined_call_operand.vmem [shape: f32[2,8,2048], index: 0, kind: input, shape index: {}]
  %s1 = inlined_call_operand.vmem [shape: bf16[2048,256], index: 1, kind: input, shape index: {}]
  %s2 = inlined_call_operand.vmem [shape: f32[1,256], index: 2, kind: input, shape index: {}]
  %s3 = inlined_call_operand.vmem [shape: bf16[256,256], index: 3, kind: input, shape index: {}]
  %s4 = inlined_call_operand.vmem [shape: f32[1,256], index: 4, kind: input, shape index: {}]
  %s5 = inlined_call_operand.vmem [shape: bf16[256,256], index: 5, kind: input, shape index: {}]
  %s6 = inlined_call_operand.vmem [shape: f32[1,256], index: 6, kind: input, shape index: {}]
  %s7 = inlined_call_operand.vmem [shape: f32[1,256], index: 7, kind: input, shape index: {}]
  %s8 = inlined_call_operand.<no memory space> [shape: f32[1,1], index: 8, kind: input, shape index: {}]
  %s9 = inlined_call_operand.vmem [shape: f32[2,256], index: 9, kind: output, shape index: {0}]
  %s10 = inlined_call_operand.hbm [shape: f32[2,128], index: 10, kind: output, shape index: {1}]
  %11 = xla_tuple %s9, %s10
  %s12 = sld [smem:[#allocation0]]
  $region54: #{gated_attention_forward.1} parent=0
    _
  %s14 = ssub.s32 1, %s12
  %s15 = scalar_select 0, %s14, %s12
  %v16 = vstv %s8
  %17 = vst [vmem:[#allocation2] sm:$0x1] %v16
  $region1: #{gated_attention_forward.1} parent=0
    #allocation3 [shape = 'u8[1024]{0}', space=vmem, size = 0x400, scoped, tag = 'output window, operand 1, single buffered']
    #allocation4 [shape = 's32[1]{0}', space=sflag, size = 0x4, scoped, tag = 'scoped memory for gated_attention_forward.1']
    %18 = vsyncpa [#allocation4], 0
    // Predicated region
    $region2: #{gated_attention_forward.1} parent=1 // pred_check
      _
    $region3: #{gated_attention_forward.1} parent=1 // pred_check_branch
      %20 = sbr.rel (0) target = $region5
    $region4: #{gated_attention_forward.1} parent=1 // pred_region
      _
    $region5: #{gated_attention_forward.1} parent=1 // pred_fallthru
      _
    // Predicated region
    $region6: #{gated_attention_forward.1} parent=1 // pred_check
      _
    $region7: #{gated_attention_forward.1} parent=1 // pred_check_branch
      %22 = sbr.rel (0) target = $region9
    $region8: #{gated_attention_forward.1} parent=1 // pred_region
      _
    $region9: #{gated_attention_forward.1} parent=1 // pred_fallthru
      _
    // Predicated region
    $region10: #{gated_attention_forward.1} parent=1 // pred_check
      _
    $region11: #{gated_attention_forward.1} parent=1 // pred_check_branch
      %24 = sbr.rel (0) target = $region13
    $region12: #{gated_attention_forward.1} parent=1 // pred_region
      _
    $region13: #{gated_attention_forward.1} parent=1 // pred_fallthru
      _
    // Predicated region
    $region14: #{gated_attention_forward.1} parent=1 // pred_check
      _
    $region15: #{gated_attention_forward.1} parent=1 // pred_check_branch
      %26 = sbr.rel (0) target = $region17
    $region16: #{gated_attention_forward.1} parent=1 // pred_region
      _
    $region17: #{gated_attention_forward.1} parent=1 // pred_fallthru
      _
    // Predicated region
    $region18: #{gated_attention_forward.1} parent=1 // pred_check
      _
    $region19: #{gated_attention_forward.1} parent=1 // pred_check_branch
      %28 = sbr.rel (0) target = $region21
    $region20: #{gated_attention_forward.1} parent=1 // pred_region
      _
    $region21: #{gated_attention_forward.1} parent=1 // pred_fallthru
      _
    // Predicated region
    $region22: #{gated_attention_forward.1} parent=1 // pred_check
      _
    $region23: #{gated_attention_forward.1} parent=1 // pred_check_branch
      %30 = sbr.rel (0) target = $region25
    $region24: #{gated_attention_forward.1} parent=1 // pred_region
      _
    $region25: #{gated_attention_forward.1} parent=1 // pred_fallthru
      _
    // Predicated region
    $region26: #{gated_attention_forward.1} parent=1 // pred_check
      _
    $region27: #{gated_attention_forward.1} parent=1 // pred_check_branch
      %32 = sbr.rel (0) target = $region29
    $region28: #{gated_attention_forward.1} parent=1 // pred_region
      _
    $region29: #{gated_attention_forward.1} parent=1 // pred_fallthru
      _
    // Predicated region
    $region30: #{gated_attention_forward.1} parent=1 // pred_check
      _
    $region31: #{gated_attention_forward.1} parent=1 // pred_check_branch
      %34 = sbr.rel (0) target = $region33
    $region32: #{gated_attention_forward.1} parent=1 // pred_region
      _
    $region33: #{gated_attention_forward.1} parent=1 // pred_fallthru
      _
    // Predicated region
    $region34: #{gated_attention_forward.1} parent=1 // pred_check
      _
    $region35: #{gated_attention_forward.1} parent=1 // pred_check_branch
      %36 = sbr.rel (0) target = $region37
    $region36: #{gated_attention_forward.1} parent=1 // pred_region
      _
    $region37: #{gated_attention_forward.1} parent=1 // pred_fallthru
      _
    %v37 = vld [vmem:[%s0] sm:$0xff]
    %v38 = vld [vmem:[%s0 + $0x8] sm:$0xff]
    %v39 = vld [vmem:[%s0 + $0x10] sm:$0xff]
    %v40 = vld [vmem:[%s0 + $0x18] sm:$0xff]
    %v41 = vld [vmem:[%s0 + $0x20] sm:$0xff]
    %v42 = vld [vmem:[%s0 + $0x28] sm:$0xff]
    %v43 = vld [vmem:[%s0 + $0x30] sm:$0xff]
    %v44 = vld [vmem:[%s0 + $0x38] sm:$0xff]
    %v45 = vld [vmem:[%s0 + $0x40] sm:$0xff]
    %v46 = vld [vmem:[%s0 + $0x48] sm:$0xff]
    %v47 = vld [vmem:[%s0 + $0x50] sm:$0xff]
    %v48 = vld [vmem:[%s0 + $0x58] sm:$0xff]
    %v49 = vld [vmem:[%s0 + $0x60] sm:$0xff]
    %v50 = vld [vmem:[%s0 + $0x68] sm:$0xff]
    %v51 = vld [vmem:[%s0 + $0x70] sm:$0xff]
    %v52 = vld [vmem:[%s0 + $0x78] sm:$0xff]
    %v53 = vld [vmem:[%s0 + $0x80] sm:$0xff]
    %v54 = vld [vmem:[%s0 + $0x88] sm:$0xff]
    %v55 = vld [vmem:[%s0 + $0x90] sm:$0xff]
    %v56 = vld [vmem:[%s0 + $0x98] sm:$0xff]
    %v57 = vld [vmem:[%s0 + $0xa0] sm:$0xff]
    %v58 = vld [vmem:[%s0 + $0xa8] sm:$0xff]
    %v59 = vld [vmem:[%s0 + $0xb0] sm:$0xff]
    %v60 = vld [vmem:[%s0 + $0xb8] sm:$0xff]
    %v61 = vld [vmem:[%s0 + $0xc0] sm:$0xff]
    %v62 = vld [vmem:[%s0 + $0xc8] sm:$0xff]
    %v63 = vld [vmem:[%s0 + $0xd0] sm:$0xff]
    %v64 = vld [vmem:[%s0 + $0xd8] sm:$0xff]
    %v65 = vld [vmem:[%s0 + $0xe0] sm:$0xff]
    %v66 = vld [vmem:[%s0 + $0xe8] sm:$0xff]
    %v67 = vld [vmem:[%s0 + $0xf0] sm:$0xff]
    %v68 = vld [vmem:[%s0 + $0xf8] sm:$0xff]
    %v69 = vpack.c.bf16 %v53, %v37
    %v70 = vpack.c.bf16 %v54, %v38
    %v71 = vpack.c.bf16 %v55, %v39
    %v72 = vpack.c.bf16 %v56, %v40
    %v73 = vpack.c.bf16 %v57, %v41
    %v74 = vpack.c.bf16 %v58, %v42
    %v75 = vpack.c.bf16 %v59, %v43
    %v76 = vpack.c.bf16 %v60, %v44
    %v77 = vpack.c.bf16 %v61, %v45
    %v78 = vpack.c.bf16 %v62, %v46
    %v79 = vpack.c.bf16 %v63, %v47
    %v80 = vpack.c.bf16 %v64, %v48
    %v81 = vpack.c.bf16 %v65, %v49
    %v82 = vpack.c.bf16 %v66, %v50
    %v83 = vpack.c.bf16 %v67, %v51
    %v84 = vpack.c.bf16 %v68, %v52
    %v85 = vld [vmem:[%s1] sm:$0xff]
    %v86 = vld [vmem:[%s1 + $0x8] sm:$0xff]
    %v87 = vld [vmem:[%s1 + $0x10] sm:$0xff]
    %v88 = vld [vmem:[%s1 + $0x18] sm:$0xff]
    %v89 = vld [vmem:[%s1 + $0x20] sm:$0xff]
    %v90 = vld [vmem:[%s1 + $0x28] sm:$0xff]
    %v91 = vld [vmem:[%s1 + $0x30] sm:$0xff]
    %v92 = vld [vmem:[%s1 + $0x38] sm:$0xff]
    %v93 = vld [vmem:[%s1 + $0x40] sm:$0xff]
    %v94 = vld [vmem:[%s1 + $0x48] sm:$0xff]
    %v95 = vld [vmem:[%s1 + $0x50] sm:$0xff]
    %v96 = vld [vmem:[%s1 + $0x58] sm:$0xff]
    %v97 = vld [vmem:[%s1 + $0x60] sm:$0xff]
    %v98 = vld [vmem:[%s1 + $0x68] sm:$0xff]
    %v99 = vld [vmem:[%s1 + $0x70] sm:$0xff]
    %v100 = vld [vmem:[%s1 + $0x78] sm:$0xff]
    %v101 = vld [vmem:[%s1 + $0x80] sm:$0xff]
    %v102 = vld [vmem:[%s1 + $0x88] sm:$0xff]
    %v103 = vld [vmem:[%s1 + $0x90] sm:$0xff]
    %v104 = vld [vmem:[%s1 + $0x98] sm:$0xff]
    %v105 = vld [vmem:[%s1 + $0xa0] sm:$0xff]
    %v106 = vld [vmem:[%s1 + $0xa8] sm:$0xff]
    %v107 = vld [vmem:[%s1 + $0xb0] sm:$0xff]
    %v108 = vld [vmem:[%s1 + $0xb8] sm:$0xff]
    %v109 = vld [vmem:[%s1 + $0xc0] sm:$0xff]
    %v110 = vld [vmem:[%s1 + $0xc8] sm:$0xff]
    %v111 = vld [vmem:[%s1 + $0xd0] sm:$0xff]
    %v112 = vld [vmem:[%s1 + $0xd8] sm:$0xff]
    %v113 = vld [vmem:[%s1 + $0xe0] sm:$0xff]
    %v114 = vld [vmem:[%s1 + $0xe8] sm:$0xff]
    %v115 = vld [vmem:[%s1 + $0xf0] sm:$0xff]
    %v116 = vld [vmem:[%s1 + $0xf8] sm:$0xff]
    %v117 = vld [vmem:[%s1 + $0x100] sm:$0xff]
    %v118 = vld [vmem:[%s1 + $0x108] sm:$0xff]
    %v119 = vld [vmem:[%s1 + $0x110] sm:$0xff]
    %v120 = vld [vmem:[%s1 + $0x118] sm:$0xff]
    %v121 = vld [vmem:[%s1 + $0x120] sm:$0xff]
    %v122 = vld [vmem:[%s1 + $0x128] sm:$0xff]
    %v123 = vld [vmem:[%s1 + $0x130] sm:$0xff]
    %v124 = vld [vmem:[%s1 + $0x138] sm:$0xff]
    %v125 = vld [vmem:[%s1 + $0x140] sm:$0xff]
    %v126 = vld [vmem:[%s1 + $0x148] sm:$0xff]
    %v127 = vld [vmem:[%s1 + $0x150] sm:$0xff]
    %v128 = vld [vmem:[%s1 + $0x158] sm:$0xff]
    %v129 = vld [vmem:[%s1 + $0x160] sm:$0xff]
    %v130 = vld [vmem:[%s1 + $0x168] sm:$0xff]
    %v131 = vld [vmem:[%s1 + $0x170] sm:$0xff]
    %v132 = vld [vmem:[%s1 + $0x178] sm:$0xff]
    %v133 = vld [vmem:[%s1 + $0x180] sm:$0xff]
    %v134 = vld [vmem:[%s1 + $0x188] sm:$0xff]
    %v135 = vld [vmem:[%s1 + $0x190] sm:$0xff]
    %v136 = vld [vmem:[%s1 + $0x198] sm:$0xff]
    %v137 = vld [vmem:[%s1 + $0x1a0] sm:$0xff]
    %v138 = vld [vmem:[%s1 + $0x1a8] sm:$0xff]
    %v139 = vld [vmem:[%s1 + $0x1b0] sm:$0xff]
    %v140 = vld [vmem:[%s1 + $0x1b8] sm:$0xff]
    %v141 = vld [vmem:[%s1 + $0x1c0] sm:$0xff]
    %v142 = vld [vmem:[%s1 + $0x1c8] sm:$0xff]
    %v143 = vld [vmem:[%s1 + $0x1d0] sm:$0xff]
    %v144 = vld [vmem:[%s1 + $0x1d8] sm:$0xff]
    %v145 = vld [vmem:[%s1 + $0x1e0] sm:$0xff]
    %v146 = vld [vmem:[%s1 + $0x1e8] sm:$0xff]
    %v147 = vld [vmem:[%s1 + $0x1f0] sm:$0xff]
    %v148 = vld [vmem:[%s1 + $0x1f8] sm:$0xff]
    %v149 = vld [vmem:[%s1 + $0x200] sm:$0xff]
    %v150 = vld [vmem:[%s1 + $0x208] sm:$0xff]
    %v151 = vld [vmem:[%s1 + $0x210] sm:$0xff]
    %v152 = vld [vmem:[%s1 + $0x218] sm:$0xff]
    %v153 = vld [vmem:[%s1 + $0x220] sm:$0xff]
    %v154 = vld [vmem:[%s1 + $0x228] sm:$0xff]
    %v155 = vld [vmem:[%s1 + $0x230] sm:$0xff]
    %v156 = vld [vmem:[%s1 + $0x238] sm:$0xff]
    %v157 = vld [vmem:[%s1 + $0x240] sm:$0xff]
    %v158 = vld [vmem:[%s1 + $0x248] sm:$0xff]
    %v159 = vld [vmem:[%s1 + $0x250] sm:$0xff]
    %v160 = vld [vmem:[%s1 + $0x258] sm:$0xff]
    %v161 = vld [vmem:[%s1 + $0x260] sm:$0xff]
    %v162 = vld [vmem:[%s1 + $0x268] sm:$0xff]
    %v163 = vld [vmem:[%s1 + $0x270] sm:$0xff]
    %v164 = vld [vmem:[%s1 + $0x278] sm:$0xff]
    %v165 = vld [vmem:[%s1 + $0x280] sm:$0xff]
    %v166 = vld [vmem:[%s1 + $0x288] sm:$0xff]
    %v167 = vld [vmem:[%s1 + $0x290] sm:$0xff]
    %v168 = vld [vmem:[%s1 + $0x298] sm:$0xff]
    %v169 = vld [vmem:[%s1 + $0x2a0] sm:$0xff]
    %v170 = vld [vmem:[%s1 + $0x2a8] sm:$0xff]
    %v171 = vld [vmem:[%s1 + $0x2b0] sm:$0xff]
    %v172 = vld [vmem:[%s1 + $0x2b8] sm:$0xff]
    %v173 = vld [vmem:[%s1 + $0x2c0] sm:$0xff]
    %v174 = vld [vmem:[%s1 + $0x2c8] sm:$0xff]
    %v175 = vld [vmem:[%s1 + $0x2d0] sm:$0xff]
    %v176 = vld [vmem:[%s1 + $0x2d8] sm:$0xff]
    %v177 = vld [vmem:[%s1 + $0x2e0] sm:$0xff]
    %v178 = vld [vmem:[%s1 + $0x2e8] sm:$0xff]
    %v179 = vld [vmem:[%s1 + $0x2f0] sm:$0xff]
    %v180 = vld [vmem:[%s1 + $0x2f8] sm:$0xff]
    %v181 = vld [vmem:[%s1 + $0x300] sm:$0xff]
    %v182 = vld [vmem:[%s1 + $0x308] sm:$0xff]
    %v183 = vld [vmem:[%s1 + $0x310] sm:$0xff]
    %v184 = vld [vmem:[%s1 + $0x318] sm:$0xff]
    %v185 = vld [vmem:[%s1 + $0x320] sm:$0xff]
    %v186 = vld [vmem:[%s1 + $0x328] sm:$0xff]
    %v187 = vld [vmem:[%s1 + $0x330] sm:$0xff]
    %v188 = vld [vmem:[%s1 + $0x338] sm:$0xff]
    %v189 = vld [vmem:[%s1 + $0x340] sm:$0xff]
    %v190 = vld [vmem:[%s1 + $0x348] sm:$0xff]
    %v191 = vld [vmem:[%s1 + $0x350] sm:$0xff]
    %v192 = vld [vmem:[%s1 + $0x358] sm:$0xff]
    %v193 = vld [vmem:[%s1 + $0x360] sm:$0xff]
    %v194 = vld [vmem:[%s1 + $0x368] sm:$0xff]
    %v195 = vld [vmem:[%s1 + $0x370] sm:$0xff]
    %v196 = vld [vmem:[%s1 + $0x378] sm:$0xff]
    %v197 = vld [vmem:[%s1 + $0x380] sm:$0xff]
    %v198 = vld [vmem:[%s1 + $0x388] sm:$0xff]
    %v199 = vld [vmem:[%s1 + $0x390] sm:$0xff]
    %v200 = vld [vmem:[%s1 + $0x398] sm:$0xff]
    %v201 = vld [vmem:[%s1 + $0x3a0] sm:$0xff]
    %v202 = vld [vmem:[%s1 + $0x3a8] sm:$0xff]
    %v203 = vld [vmem:[%s1 + $0x3b0] sm:$0xff]
    %v204 = vld [vmem:[%s1 + $0x3b8] sm:$0xff]
    %v205 = vld [vmem:[%s1 + $0x3c0] sm:$0xff]
    %v206 = vld [vmem:[%s1 + $0x3c8] sm:$0xff]
    %v207 = vld [vmem:[%s1 + $0x3d0] sm:$0xff]
    %v208 = vld [vmem:[%s1 + $0x3d8] sm:$0xff]
    %v209 = vld [vmem:[%s1 + $0x3e0] sm:$0xff]
    %v210 = vld [vmem:[%s1 + $0x3e8] sm:$0xff]
    %v211 = vld [vmem:[%s1 + $0x3f0] sm:$0xff]
    %v212 = vld [vmem:[%s1 + $0x3f8] sm:$0xff]
    %v213 = vld [vmem:[%s1 + $0x400] sm:$0xff]
    %v214 = vld [vmem:[%s1 + $0x408] sm:$0xff]
    %v215 = vld [vmem:[%s1 + $0x410] sm:$0xff]
    %v216 = vld [vmem:[%s1 + $0x418] sm:$0xff]
    %v217 = vld [vmem:[%s1 + $0x420] sm:$0xff]
    %v218 = vld [vmem:[%s1 + $0x428] sm:$0xff]
    %v219 = vld [vmem:[%s1 + $0x430] sm:$0xff]
    %v220 = vld [vmem:[%s1 + $0x438] sm:$0xff]
    %v221 = vld [vmem:[%s1 + $0x440] sm:$0xff]
    %v222 = vld [vmem:[%s1 + $0x448] sm:$0xff]
    %v223 = vld [vmem:[%s1 + $0x450] sm:$0xff]
    %v224 = vld [vmem:[%s1 + $0x458] sm:$0xff]
    %v225 = vld [vmem:[%s1 + $0x460] sm:$0xff]
    %v226 = vld [vmem:[%s1 + $0x468] sm:$0xff]
    %v227 = vld [vmem:[%s1 + $0x470] sm:$0xff]
    %v228 = vld [vmem:[%s1 + $0x478] sm:$0xff]
    %v229 = vld [vmem:[%s1 + $0x480] sm:$0xff]
    %v230 = vld [vmem:[%s1 + $0x488] sm:$0xff]
    %v231 = vld [vmem:[%s1 + $0x490] sm:$0xff]
    %v232 = vld [vmem:[%s1 + $0x498] sm:$0xff]
    %v233 = vld [vmem:[%s1 + $0x4a0] sm:$0xff]
    %v234 = vld [vmem:[%s1 + $0x4a8] sm:$0xff]
    %v235 = vld [vmem:[%s1 + $0x4b0] sm:$0xff]
    %v236 = vld [vmem:[%s1 + $0x4b8] sm:$0xff]
    %v237 = vld [vmem:[%s1 + $0x4c0] sm:$0xff]
    %v238 = vld [vmem:[%s1 + $0x4c8] sm:$0xff]
    %v239 = vld [vmem:[%s1 + $0x4d0] sm:$0xff]
    %v240 = vld [vmem:[%s1 + $0x4d8] sm:$0xff]
    %v241 = vld [vmem:[%s1 + $0x4e0] sm:$0xff]
    %v242 = vld [vmem:[%s1 + $0x4e8] sm:$0xff]
    %v243 = vld [vmem:[%s1 + $0x4f0] sm:$0xff]
    %v244 = vld [vmem:[%s1 + $0x4f8] sm:$0xff]
    %v245 = vld [vmem:[%s1 + $0x500] sm:$0xff]
    %v246 = vld [vmem:[%s1 + $0x508] sm:$0xff]
    %v247 = vld [vmem:[%s1 + $0x510] sm:$0xff]
    %v248 = vld [vmem:[%s1 + $0x518] sm:$0xff]
    %v249 = vld [vmem:[%s1 + $0x520] sm:$0xff]
    %v250 = vld [vmem:[%s1 + $0x528] sm:$0xff]
    %v251 = vld [vmem:[%s1 + $0x530] sm:$0xff]
    %v252 = vld [vmem:[%s1 + $0x538] sm:$0xff]
    %v253 = vld [vmem:[%s1 + $0x540] sm:$0xff]
    %v254 = vld [vmem:[%s1 + $0x548] sm:$0xff]
    %v255 = vld [vmem:[%s1 + $0x550] sm:$0xff]
    %v256 = vld [vmem:[%s1 + $0x558] sm:$0xff]
    %v257 = vld [vmem:[%s1 + $0x560] sm:$0xff]
    %v258 = vld [vmem:[%s1 + $0x568] sm:$0xff]
    %v259 = vld [vmem:[%s1 + $0x570] sm:$0xff]
    %v260 = vld [vmem:[%s1 + $0x578] sm:$0xff]
    %v261 = vld [vmem:[%s1 + $0x580] sm:$0xff]
    %v262 = vld [vmem:[%s1 + $0x588] sm:$0xff]
    %v263 = vld [vmem:[%s1 + $0x590] sm:$0xff]
    %v264 = vld [vmem:[%s1 + $0x598] sm:$0xff]
    %v265 = vld [vmem:[%s1 + $0x5a0] sm:$0xff]
    %v266 = vld [vmem:[%s1 + $0x5a8] sm:$0xff]
    %v267 = vld [vmem:[%s1 + $0x5b0] sm:$0xff]
    %v268 = vld [vmem:[%s1 + $0x5b8] sm:$0xff]
    %v269 = vld [vmem:[%s1 + $0x5c0] sm:$0xff]
    %v270 = vld [vmem:[%s1 + $0x5c8] sm:$0xff]
    %v271 = vld [vmem:[%s1 + $0x5d0] sm:$0xff]
    %v272 = vld [vmem:[%s1 + $0x5d8] sm:$0xff]
    %v273 = vld [vmem:[%s1 + $0x5e0] sm:$0xff]
    %v274 = vld [vmem:[%s1 + $0x5e8] sm:$0xff]
    %v275 = vld [vmem:[%s1 + $0x5f0] sm:$0xff]
    %v276 = vld [vmem:[%s1 + $0x5f8] sm:$0xff]
    %v277 = vld [vmem:[%s1 + $0x600] sm:$0xff]
    %v278 = vld [vmem:[%s1 + $0x608] sm:$0xff]
    %v279 = vld [vmem:[%s1 + $0x610] sm:$0xff]
    %v280 = vld [vmem:[%s1 + $0x618] sm:$0xff]
    %v281 = vld [vmem:[%s1 + $0x620] sm:$0xff]
    %v282 = vld [vmem:[%s1 + $0x628] sm:$0xff]
    %v283 = vld [vmem:[%s1 + $0x630] sm:$0xff]
    %v284 = vld [vmem:[%s1 + $0x638] sm:$0xff]
    %v285 = vld [vmem:[%s1 + $0x640] sm:$0xff]
    %v286 = vld [vmem:[%s1 + $0x648] sm:$0xff]
    %v287 = vld [vmem:[%s1 + $0x650] sm:$0xff]
    %v288 = vld [vmem:[%s1 + $0x658] sm:$0xff]
    %v289 = vld [vmem:[%s1 + $0x660] sm:$0xff]
    %v290 = vld [vmem:[%s1 + $0x668] sm:$0xff]
    %v291 = vld [vmem:[%s1 + $0x670] sm:$0xff]
    %v292 = vld [vmem:[%s1 + $0x678] sm:$0xff]
    %v293 = vld [vmem:[%s1 + $0x680] sm:$0xff]
    %v294 = vld [vmem:[%s1 + $0x688] sm:$0xff]
    %v295 = vld [vmem:[%s1 + $0x690] sm:$0xff]
    %v296 = vld [vmem:[%s1 + $0x698] sm:$0xff]
    %v297 = vld [vmem:[%s1 + $0x6a0] sm:$0xff]
    %v298 = vld [vmem:[%s1 + $0x6a8] sm:$0xff]
    %v299 = vld [vmem:[%s1 + $0x6b0] sm:$0xff]
    %v300 = vld [vmem:[%s1 + $0x6b8] sm:$0xff]
    %v301 = vld [vmem:[%s1 + $0x6c0] sm:$0xff]
    %v302 = vld [vmem:[%s1 + $0x6c8] sm:$0xff]
    %v303 = vld [vmem:[%s1 + $0x6d0] sm:$0xff]
    %v304 = vld [vmem:[%s1 + $0x6d8] sm:$0xff]
    %v305 = vld [vmem:[%s1 + $0x6e0] sm:$0xff]
    %v306 = vld [vmem:[%s1 + $0x6e8] sm:$0xff]
    %v307 = vld [vmem:[%s1 + $0x6f0] sm:$0xff]
    %v308 = vld [vmem:[%s1 + $0x6f8] sm:$0xff]
    %v309 = vld [vmem:[%s1 + $0x700] sm:$0xff]
    %v310 = vld [vmem:[%s1 + $0x708] sm:$0xff]
    %v311 = vld [vmem:[%s1 + $0x710] sm:$0xff]
    %v312 = vld [vmem:[%s1 + $0x718] sm:$0xff]
    %v313 = vld [vmem:[%s1 + $0x720] sm:$0xff]
    %v314 = vld [vmem:[%s1 + $0x728] sm:$0xff]
    %v315 = vld [vmem:[%s1 + $0x730] sm:$0xff]
    %v316 = vld [vmem:[%s1 + $0x738] sm:$0xff]
    %v317 = vld [vmem:[%s1 + $0x740] sm:$0xff]
    %v318 = vld [vmem:[%s1 + $0x748] sm:$0xff]
    %v319 = vld [vmem:[%s1 + $0x750] sm:$0xff]
    %v320 = vld [vmem:[%s1 + $0x758] sm:$0xff]
    %v321 = vld [vmem:[%s1 + $0x760] sm:$0xff]
    %v322 = vld [vmem:[%s1 + $0x768] sm:$0xff]
    %v323 = vld [vmem:[%s1 + $0x770] sm:$0xff]
    %v324 = vld [vmem:[%s1 + $0x778] sm:$0xff]
    %v325 = vld [vmem:[%s1 + $0x780] sm:$0xff]
    %v326 = vld [vmem:[%s1 + $0x788] sm:$0xff]
    %v327 = vld [vmem:[%s1 + $0x790] sm:$0xff]
    %v328 = vld [vmem:[%s1 + $0x798] sm:$0xff]
    %v329 = vld [vmem:[%s1 + $0x7a0] sm:$0xff]
    %v330 = vld [vmem:[%s1 + $0x7a8] sm:$0xff]
    %v331 = vld [vmem:[%s1 + $0x7b0] sm:$0xff]
    %v332 = vld [vmem:[%s1 + $0x7b8] sm:$0xff]
    %v333 = vld [vmem:[%s1 + $0x7c0] sm:$0xff]
    %v334 = vld [vmem:[%s1 + $0x7c8] sm:$0xff]
    %v335 = vld [vmem:[%s1 + $0x7d0] sm:$0xff]
    %v336 = vld [vmem:[%s1 + $0x7d8] sm:$0xff]
    %v337 = vld [vmem:[%s1 + $0x7e0] sm:$0xff]
    %v338 = vld [vmem:[%s1 + $0x7e8] sm:$0xff]
    %v339 = vld [vmem:[%s1 + $0x7f0] sm:$0xff]
    %v340 = vld [vmem:[%s1 + $0x7f8] sm:$0xff]
    %v341 = vld [vmem:[%s2] sm:$0x3]
    %v343 = vlaneseq
    %v344 = vshrl.u32 %v343, 7
    %v345 = vsub.s32 0, %v344
    %v346 = vrot.slane %v341, %v345
    %v347 = vlaneseq
    %v348 = vshrl.u32 %v347, 7
    %v349 = vsub.s32 1, %v348
    %v350 = vrot.slane %v341, %v349
    %v609 = vunpack.c.l.b16 %v85
    %v610 = vunpack.c.h.b16 %v85
    %v611 = vunpack.c.l.b16 %v86
    %v612 = vunpack.c.h.b16 %v86
    %v613 = vunpack.c.l.b16 %v87
    %v614 = vunpack.c.h.b16 %v87
    %v615 = vunpack.c.l.b16 %v88
    %v616 = vunpack.c.h.b16 %v88
    %v617 = vunpack.c.l.b16 %v89
    %v618 = vunpack.c.h.b16 %v89
    %v619 = vunpack.c.l.b16 %v90
    %v620 = vunpack.c.h.b16 %v90
    %v621 = vunpack.c.l.b16 %v91
    %v622 = vunpack.c.h.b16 %v91
    %v623 = vunpack.c.l.b16 %v92
    %v624 = vunpack.c.h.b16 %v92
    %v625 = vunpack.c.l.b16 %v93
    %v626 = vunpack.c.h.b16 %v93
    %v627 = vunpack.c.l.b16 %v94
    %v628 = vunpack.c.h.b16 %v94
    %v629 = vunpack.c.l.b16 %v95
    %v630 = vunpack.c.h.b16 %v95
    %v631 = vunpack.c.l.b16 %v96
    %v632 = vunpack.c.h.b16 %v96
    %v633 = vunpack.c.l.b16 %v97
    %v634 = vunpack.c.h.b16 %v97
    %v635 = vunpack.c.l.b16 %v98
    %v636 = vunpack.c.h.b16 %v98
    %v637 = vunpack.c.l.b16 %v99
    %v638 = vunpack.c.h.b16 %v99
    %v639 = vunpack.c.l.b16 %v100
    %v640 = vunpack.c.h.b16 %v100
    %v641 = vunpack.c.l.b16 %v101
    %v642 = vunpack.c.h.b16 %v101
    %v643 = vunpack.c.l.b16 %v102
    %v644 = vunpack.c.h.b16 %v102
    %v645 = vunpack.c.l.b16 %v103
    %v646 = vunpack.c.h.b16 %v103
    %v647 = vunpack.c.l.b16 %v104
    %v648 = vunpack.c.h.b16 %v104
    %v649 = vunpack.c.l.b16 %v105
    %v650 = vunpack.c.h.b16 %v105
    %v651 = vunpack.c.l.b16 %v106
    %v652 = vunpack.c.h.b16 %v106
    %v653 = vunpack.c.l.b16 %v107
    %v654 = vunpack.c.h.b16 %v107
    %v655 = vunpack.c.l.b16 %v108
    %v656 = vunpack.c.h.b16 %v108
    %v657 = vunpack.c.l.b16 %v109
    %v658 = vunpack.c.h.b16 %v109
    %v659 = vunpack.c.l.b16 %v110
    %v660 = vunpack.c.h.b16 %v110
    %v661 = vunpack.c.l.b16 %v111
    %v662 = vunpack.c.h.b16 %v111
    %v663 = vunpack.c.l.b16 %v112
    %v664 = vunpack.c.h.b16 %v112
    %v665 = vunpack.c.l.b16 %v113
    %v666 = vunpack.c.h.b16 %v113
    %v667 = vunpack.c.l.b16 %v114
    %v668 = vunpack.c.h.b16 %v114
    %v669 = vunpack.c.l.b16 %v115
    %v670 = vunpack.c.h.b16 %v115
    %v671 = vunpack.c.l.b16 %v116
    %v672 = vunpack.c.h.b16 %v116
    %v673 = vunpack.c.l.b16 %v117
    %v674 = vunpack.c.h.b16 %v117
    %v675 = vunpack.c.l.b16 %v118
    %v676 = vunpack.c.h.b16 %v118
    %v677 = vunpack.c.l.b16 %v119
    %v678 = vunpack.c.h.b16 %v119
    %v679 = vunpack.c.l.b16 %v120
    %v680 = vunpack.c.h.b16 %v120
    %v681 = vunpack.c.l.b16 %v121
    %v682 = vunpack.c.h.b16 %v121
    %v683 = vunpack.c.l.b16 %v122
    %v684 = vunpack.c.h.b16 %v122
    %v685 = vunpack.c.l.b16 %v123
    %v686 = vunpack.c.h.b16 %v123
    %v687 = vunpack.c.l.b16 %v124
    %v688 = vunpack.c.h.b16 %v124
    %v689 = vunpack.c.l.b16 %v125
    %v690 = vunpack.c.h.b16 %v125
    %v691 = vunpack.c.l.b16 %v126
    %v692 = vunpack.c.h.b16 %v126
    %v693 = vunpack.c.l.b16 %v127
    %v694 = vunpack.c.h.b16 %v127
    %v695 = vunpack.c.l.b16 %v128
    %v696 = vunpack.c.h.b16 %v128
    %v697 = vunpack.c.l.b16 %v129
    %v698 = vunpack.c.h.b16 %v129
    %v699 = vunpack.c.l.b16 %v130
    %v700 = vunpack.c.h.b16 %v130
    %v701 = vunpack.c.l.b16 %v131
    %v702 = vunpack.c.h.b16 %v131
    %v703 = vunpack.c.l.b16 %v132
    %v704 = vunpack.c.h.b16 %v132
    %v705 = vunpack.c.l.b16 %v133
    %v706 = vunpack.c.h.b16 %v133
    %v707 = vunpack.c.l.b16 %v134
    %v708 = vunpack.c.h.b16 %v134
    %v709 = vunpack.c.l.b16 %v135
    %v710 = vunpack.c.h.b16 %v135
    %v711 = vunpack.c.l.b16 %v136
    %v712 = vunpack.c.h.b16 %v136
    %v713 = vunpack.c.l.b16 %v137
    %v714 = vunpack.c.h.b16 %v137
    %v715 = vunpack.c.l.b16 %v138
    %v716 = vunpack.c.h.b16 %v138
    %v717 = vunpack.c.l.b16 %v139
    %v718 = vunpack.c.h.b16 %v139
    %v719 = vunpack.c.l.b16 %v140
    %v720 = vunpack.c.h.b16 %v140
    %v721 = vunpack.c.l.b16 %v141
    %v722 = vunpack.c.h.b16 %v141
    %v723 = vunpack.c.l.b16 %v142
    %v724 = vunpack.c.h.b16 %v142
    %v725 = vunpack.c.l.b16 %v143
    %v726 = vunpack.c.h.b16 %v143
    %v727 = vunpack.c.l.b16 %v144
    %v728 = vunpack.c.h.b16 %v144
    %v729 = vunpack.c.l.b16 %v145
    %v730 = vunpack.c.h.b16 %v145
    %v731 = vunpack.c.l.b16 %v146
    %v732 = vunpack.c.h.b16 %v146
    %v733 = vunpack.c.l.b16 %v147
    %v734 = vunpack.c.h.b16 %v147
    %v735 = vunpack.c.l.b16 %v148
    %v736 = vunpack.c.h.b16 %v148
    %v737 = vunpack.c.l.b16 %v149
    %v738 = vunpack.c.h.b16 %v149
    %v739 = vunpack.c.l.b16 %v150
    %v740 = vunpack.c.h.b16 %v150
    %v741 = vunpack.c.l.b16 %v151
    %v742 = vunpack.c.h.b16 %v151
    %v743 = vunpack.c.l.b16 %v152
    %v744 = vunpack.c.h.b16 %v152
    %v745 = vunpack.c.l.b16 %v153
    %v746 = vunpack.c.h.b16 %v153
    %v747 = vunpack.c.l.b16 %v154
    %v748 = vunpack.c.h.b16 %v154
    %v749 = vunpack.c.l.b16 %v155
    %v750 = vunpack.c.h.b16 %v155
    %v751 = vunpack.c.l.b16 %v156
    %v752 = vunpack.c.h.b16 %v156
    %v753 = vunpack.c.l.b16 %v157
    %v754 = vunpack.c.h.b16 %v157
    %v755 = vunpack.c.l.b16 %v158
    %v756 = vunpack.c.h.b16 %v158
    %v757 = vunpack.c.l.b16 %v159
    %v758 = vunpack.c.h.b16 %v159
    %v759 = vunpack.c.l.b16 %v160
    %v760 = vunpack.c.h.b16 %v160
    %v761 = vunpack.c.l.b16 %v161
    %v762 = vunpack.c.h.b16 %v161
    %v763 = vunpack.c.l.b16 %v162
    %v764 = vunpack.c.h.b16 %v162
    %v765 = vunpack.c.l.b16 %v163
    %v766 = vunpack.c.h.b16 %v163
    %v767 = vunpack.c.l.b16 %v164
    %v768 = vunpack.c.h.b16 %v164
    %v769 = vunpack.c.l.b16 %v165
    %v770 = vunpack.c.h.b16 %v165
    %v771 = vunpack.c.l.b16 %v166
    %v772 = vunpack.c.h.b16 %v166
    %v773 = vunpack.c.l.b16 %v167
    %v774 = vunpack.c.h.b16 %v167
    %v775 = vunpack.c.l.b16 %v168
    %v776 = vunpack.c.h.b16 %v168
    %v777 = vunpack.c.l.b16 %v169
    %v778 = vunpack.c.h.b16 %v169
    %v779 = vunpack.c.l.b16 %v170
    %v780 = vunpack.c.h.b16 %v170
    %v781 = vunpack.c.l.b16 %v171
    %v782 = vunpack.c.h.b16 %v171
    %v783 = vunpack.c.l.b16 %v172
    %v784 = vunpack.c.h.b16 %v172
    %v785 = vunpack.c.l.b16 %v173
    %v786 = vunpack.c.h.b16 %v173
    %v787 = vunpack.c.l.b16 %v174
    %v788 = vunpack.c.h.b16 %v174
    %v789 = vunpack.c.l.b16 %v175
    %v790 = vunpack.c.h.b16 %v175
    %v791 = vunpack.c.l.b16 %v176
    %v792 = vunpack.c.h.b16 %v176
    %v793 = vunpack.c.l.b16 %v177
    %v794 = vunpack.c.h.b16 %v177
    %v795 = vunpack.c.l.b16 %v178
    %v796 = vunpack.c.h.b16 %v178
    %v797 = vunpack.c.l.b16 %v179
    %v798 = vunpack.c.h.b16 %v179
    %v799 = vunpack.c.l.b16 %v180
    %v800 = vunpack.c.h.b16 %v180
    %v801 = vunpack.c.l.b16 %v181
    %v802 = vunpack.c.h.b16 %v181
    %v803 = vunpack.c.l.b16 %v182
    %v804 = vunpack.c.h.b16 %v182
    %v805 = vunpack.c.l.b16 %v183
    %v806 = vunpack.c.h.b16 %v183
    %v807 = vunpack.c.l.b16 %v184
    %v808 = vunpack.c.h.b16 %v184
    %v809 = vunpack.c.l.b16 %v185
    %v810 = vunpack.c.h.b16 %v185
    %v811 = vunpack.c.l.b16 %v186
    %v812 = vunpack.c.h.b16 %v186
    %v813 = vunpack.c.l.b16 %v187
    %v814 = vunpack.c.h.b16 %v187
    %v815 = vunpack.c.l.b16 %v188
    %v816 = vunpack.c.h.b16 %v188
    %v817 = vunpack.c.l.b16 %v189
    %v818 = vunpack.c.h.b16 %v189
    %v819 = vunpack.c.l.b16 %v190
    %v820 = vunpack.c.h.b16 %v190
    %v821 = vunpack.c.l.b16 %v191
    %v822 = vunpack.c.h.b16 %v191
    %v823 = vunpack.c.l.b16 %v192
    %v824 = vunpack.c.h.b16 %v192
    %v825 = vunpack.c.l.b16 %v193
    %v826 = vunpack.c.h.b16 %v193
    %v827 = vunpack.c.l.b16 %v194
    %v828 = vunpack.c.h.b16 %v194
    %v829 = vunpack.c.l.b16 %v195
    %v830 = vunpack.c.h.b16 %v195
    %v831 = vunpack.c.l.b16 %v196
    %v832 = vunpack.c.h.b16 %v196
    %v833 = vunpack.c.l.b16 %v197
    %v834 = vunpack.c.h.b16 %v197
    %v835 = vunpack.c.l.b16 %v198
    %v836 = vunpack.c.h.b16 %v198
    %v837 = vunpack.c.l.b16 %v199
    %v838 = vunpack.c.h.b16 %v199
    %v839 = vunpack.c.l.b16 %v200
    %v840 = vunpack.c.h.b16 %v200
    %v841 = vunpack.c.l.b16 %v201
    %v842 = vunpack.c.h.b16 %v201
    %v843 = vunpack.c.l.b16 %v202
    %v844 = vunpack.c.h.b16 %v202
    %v845 = vunpack.c.l.b16 %v203
    %v846 = vunpack.c.h.b16 %v203
    %v847 = vunpack.c.l.b16 %v204
    %v848 = vunpack.c.h.b16 %v204
    %v849 = vunpack.c.l.b16 %v205
    %v850 = vunpack.c.h.b16 %v205
    %v851 = vunpack.c.l.b16 %v206
    %v852 = vunpack.c.h.b16 %v206
    %v853 = vunpack.c.l.b16 %v207
    %v854 = vunpack.c.h.b16 %v207
    %v855 = vunpack.c.l.b16 %v208
    %v856 = vunpack.c.h.b16 %v208
    %v857 = vunpack.c.l.b16 %v209
    %v858 = vunpack.c.h.b16 %v209
    %v859 = vunpack.c.l.b16 %v210
    %v860 = vunpack.c.h.b16 %v210
    %v861 = vunpack.c.l.b16 %v211
    %v862 = vunpack.c.h.b16 %v211
    %v863 = vunpack.c.l.b16 %v212
    %v864 = vunpack.c.h.b16 %v212
    %v865 = vunpack.c.l.b16 %v213
    %v866 = vunpack.c.h.b16 %v213
    %v867 = vunpack.c.l.b16 %v214
    %v868 = vunpack.c.h.b16 %v214
    %v869 = vunpack.c.l.b16 %v215
    %v870 = vunpack.c.h.b16 %v215
    %v871 = vunpack.c.l.b16 %v216
    %v872 = vunpack.c.h.b16 %v216
    %v873 = vunpack.c.l.b16 %v217
    %v874 = vunpack.c.h.b16 %v217
    %v875 = vunpack.c.l.b16 %v218
    %v876 = vunpack.c.h.b16 %v218
    %v877 = vunpack.c.l.b16 %v219
    %v878 = vunpack.c.h.b16 %v219
    %v879 = vunpack.c.l.b16 %v220
    %v880 = vunpack.c.h.b16 %v220
    %v881 = vunpack.c.l.b16 %v221
    %v882 = vunpack.c.h.b16 %v221
    %v883 = vunpack.c.l.b16 %v222
    %v884 = vunpack.c.h.b16 %v222
    %v885 = vunpack.c.l.b16 %v223
    %v886 = vunpack.c.h.b16 %v223
    %v887 = vunpack.c.l.b16 %v224
    %v888 = vunpack.c.h.b16 %v224
    %v889 = vunpack.c.l.b16 %v225
    %v890 = vunpack.c.h.b16 %v225
    %v891 = vunpack.c.l.b16 %v226
    %v892 = vunpack.c.h.b16 %v226
    %v893 = vunpack.c.l.b16 %v227
    %v894 = vunpack.c.h.b16 %v227
    %v895 = vunpack.c.l.b16 %v228
    %v896 = vunpack.c.h.b16 %v228
    %v897 = vunpack.c.l.b16 %v229
    %v898 = vunpack.c.h.b16 %v229
    %v899 = vunpack.c.l.b16 %v230
    %v900 = vunpack.c.h.b16 %v230
    %v901 = vunpack.c.l.b16 %v231
    %v902 = vunpack.c.h.b16 %v231
    %v903 = vunpack.c.l.b16 %v232
    %v904 = vunpack.c.h.b16 %v232
    %v905 = vunpack.c.l.b16 %v233
    %v906 = vunpack.c.h.b16 %v233
    %v907 = vunpack.c.l.b16 %v234
    %v908 = vunpack.c.h.b16 %v234
    %v909 = vunpack.c.l.b16 %v235
    %v910 = vunpack.c.h.b16 %v235
    %v911 = vunpack.c.l.b16 %v236
    %v912 = vunpack.c.h.b16 %v236
    %v913 = vunpack.c.l.b16 %v237
    %v914 = vunpack.c.h.b16 %v237
    %v915 = vunpack.c.l.b16 %v238
    %v916 = vunpack.c.h.b16 %v238
    %v917 = vunpack.c.l.b16 %v239
    %v918 = vunpack.c.h.b16 %v239
    %v919 = vunpack.c.l.b16 %v240
    %v920 = vunpack.c.h.b16 %v240
    %v921 = vunpack.c.l.b16 %v241
    %v922 = vunpack.c.h.b16 %v241
    %v923 = vunpack.c.l.b16 %v242
    %v924 = vunpack.c.h.b16 %v242
    %v925 = vunpack.c.l.b16 %v243
    %v926 = vunpack.c.h.b16 %v243
    %v927 = vunpack.c.l.b16 %v244
    %v928 = vunpack.c.h.b16 %v244
    %v929 = vunpack.c.l.b16 %v245
    %v930 = vunpack.c.h.b16 %v245
    %v931 = vunpack.c.l.b16 %v246
    %v932 = vunpack.c.h.b16 %v246
    %v933 = vunpack.c.l.b16 %v247
    %v934 = vunpack.c.h.b16 %v247
    %v935 = vunpack.c.l.b16 %v248
    %v936 = vunpack.c.h.b16 %v248
    %v937 = vunpack.c.l.b16 %v249
    %v938 = vunpack.c.h.b16 %v249
    %v939 = vunpack.c.l.b16 %v250
    %v940 = vunpack.c.h.b16 %v250
    %v941 = vunpack.c.l.b16 %v251
    %v942 = vunpack.c.h.b16 %v251
    %v943 = vunpack.c.l.b16 %v252
    %v944 = vunpack.c.h.b16 %v252
    %v945 = vunpack.c.l.b16 %v253
    %v946 = vunpack.c.h.b16 %v253
    %v947 = vunpack.c.l.b16 %v254
    %v948 = vunpack.c.h.b16 %v254
    %v949 = vunpack.c.l.b16 %v255
    %v950 = vunpack.c.h.b16 %v255
    %v951 = vunpack.c.l.b16 %v256
    %v952 = vunpack.c.h.b16 %v256
    %v953 = vunpack.c.l.b16 %v257
    %v954 = vunpack.c.h.b16 %v257
    %v955 = vunpack.c.l.b16 %v258
    %v956 = vunpack.c.h.b16 %v258
    %v957 = vunpack.c.l.b16 %v259
    %v958 = vunpack.c.h.b16 %v259
    %v959 = vunpack.c.l.b16 %v260
    %v960 = vunpack.c.h.b16 %v260
    %v961 = vunpack.c.l.b16 %v261
    %v962 = vunpack.c.h.b16 %v261
    %v963 = vunpack.c.l.b16 %v262
    %v964 = vunpack.c.h.b16 %v262
    %v965 = vunpack.c.l.b16 %v263
    %v966 = vunpack.c.h.b16 %v263
    %v967 = vunpack.c.l.b16 %v264
    %v968 = vunpack.c.h.b16 %v264
    %v969 = vunpack.c.l.b16 %v265
    %v970 = vunpack.c.h.b16 %v265
    %v971 = vunpack.c.l.b16 %v266
    %v972 = vunpack.c.h.b16 %v266
    %v973 = vunpack.c.l.b16 %v267
    %v974 = vunpack.c.h.b16 %v267
    %v975 = vunpack.c.l.b16 %v268
    %v976 = vunpack.c.h.b16 %v268
    %v977 = vunpack.c.l.b16 %v269
    %v978 = vunpack.c.h.b16 %v269
    %v979 = vunpack.c.l.b16 %v270
    %v980 = vunpack.c.h.b16 %v270
    %v981 = vunpack.c.l.b16 %v271
    %v982 = vunpack.c.h.b16 %v271
    %v983 = vunpack.c.l.b16 %v272
    %v984 = vunpack.c.h.b16 %v272
    %v985 = vunpack.c.l.b16 %v273
    %v986 = vunpack.c.h.b16 %v273
    %v987 = vunpack.c.l.b16 %v274
    %v988 = vunpack.c.h.b16 %v274
    %v989 = vunpack.c.l.b16 %v275
    %v990 = vunpack.c.h.b16 %v275
    %v991 = vunpack.c.l.b16 %v276
    %v992 = vunpack.c.h.b16 %v276
    %v993 = vunpack.c.l.b16 %v277
    %v994 = vunpack.c.h.b16 %v277
    %v995 = vunpack.c.l.b16 %v278
    %v996 = vunpack.c.h.b16 %v278
    %v997 = vunpack.c.l.b16 %v279
    %v998 = vunpack.c.h.b16 %v279
    %v999 = vunpack.c.l.b16 %v280
    %v1000 = vunpack.c.h.b16 %v280
    %v1001 = vunpack.c.l.b16 %v281
    %v1002 = vunpack.c.h.b16 %v281
    %v1003 = vunpack.c.l.b16 %v282
    %v1004 = vunpack.c.h.b16 %v282
    %v1005 = vunpack.c.l.b16 %v283
    %v1006 = vunpack.c.h.b16 %v283
    %v1007 = vunpack.c.l.b16 %v284
    %v1008 = vunpack.c.h.b16 %v284
    %v1009 = vunpack.c.l.b16 %v285
    %v1010 = vunpack.c.h.b16 %v285
    %v1011 = vunpack.c.l.b16 %v286
    %v1012 = vunpack.c.h.b16 %v286
    %v1013 = vunpack.c.l.b16 %v287
    %v1014 = vunpack.c.h.b16 %v287
    %v1015 = vunpack.c.l.b16 %v288
    %v1016 = vunpack.c.h.b16 %v288
    %v1017 = vunpack.c.l.b16 %v289
    %v1018 = vunpack.c.h.b16 %v289
    %v1019 = vunpack.c.l.b16 %v290
    %v1020 = vunpack.c.h.b16 %v290
    %v1021 = vunpack.c.l.b16 %v291
    %v1022 = vunpack.c.h.b16 %v291
    %v1023 = vunpack.c.l.b16 %v292
    %v1024 = vunpack.c.h.b16 %v292
    %v1025 = vunpack.c.l.b16 %v293
    %v1026 = vunpack.c.h.b16 %v293
    %v1027 = vunpack.c.l.b16 %v294
    %v1028 = vunpack.c.h.b16 %v294
    %v1029 = vunpack.c.l.b16 %v295
    %v1030 = vunpack.c.h.b16 %v295
    %v1031 = vunpack.c.l.b16 %v296
    %v1032 = vunpack.c.h.b16 %v296
    %v1033 = vunpack.c.l.b16 %v297
    %v1034 = vunpack.c.h.b16 %v297
    %v1035 = vunpack.c.l.b16 %v298
    %v1036 = vunpack.c.h.b16 %v298
    %v1037 = vunpack.c.l.b16 %v299
    %v1038 = vunpack.c.h.b16 %v299
    %v1039 = vunpack.c.l.b16 %v300
    %v1040 = vunpack.c.h.b16 %v300
    %v1041 = vunpack.c.l.b16 %v301
    %v1042 = vunpack.c.h.b16 %v301
    %v1043 = vunpack.c.l.b16 %v302
    %v1044 = vunpack.c.h.b16 %v302
    %v1045 = vunpack.c.l.b16 %v303
    %v1046 = vunpack.c.h.b16 %v303
    %v1047 = vunpack.c.l.b16 %v304
    %v1048 = vunpack.c.h.b16 %v304
    %v1049 = vunpack.c.l.b16 %v305
    %v1050 = vunpack.c.h.b16 %v305
    %v1051 = vunpack.c.l.b16 %v306
    %v1052 = vunpack.c.h.b16 %v306
    %v1053 = vunpack.c.l.b16 %v307
    %v1054 = vunpack.c.h.b16 %v307
    %v1055 = vunpack.c.l.b16 %v308
    %v1056 = vunpack.c.h.b16 %v308
    %v1057 = vunpack.c.l.b16 %v309
    %v1058 = vunpack.c.h.b16 %v309
    %v1059 = vunpack.c.l.b16 %v310
    %v1060 = vunpack.c.h.b16 %v310
    %v1061 = vunpack.c.l.b16 %v311
    %v1062 = vunpack.c.h.b16 %v311
    %v1063 = vunpack.c.l.b16 %v312
    %v1064 = vunpack.c.h.b16 %v312
    %v1065 = vunpack.c.l.b16 %v313
    %v1066 = vunpack.c.h.b16 %v313
    %v1067 = vunpack.c.l.b16 %v314
    %v1068 = vunpack.c.h.b16 %v314
    %v1069 = vunpack.c.l.b16 %v315
    %v1070 = vunpack.c.h.b16 %v315
    %v1071 = vunpack.c.l.b16 %v316
    %v1072 = vunpack.c.h.b16 %v316
    %v1073 = vunpack.c.l.b16 %v317
    %v1074 = vunpack.c.h.b16 %v317
    %v1075 = vunpack.c.l.b16 %v318
    %v1076 = vunpack.c.h.b16 %v318
    %v1077 = vunpack.c.l.b16 %v319
    %v1078 = vunpack.c.h.b16 %v319
    %v1079 = vunpack.c.l.b16 %v320
    %v1080 = vunpack.c.h.b16 %v320
    %v1081 = vunpack.c.l.b16 %v321
    %v1082 = vunpack.c.h.b16 %v321
    %v1083 = vunpack.c.l.b16 %v322
    %v1084 = vunpack.c.h.b16 %v322
    %v1085 = vunpack.c.l.b16 %v323
    %v1086 = vunpack.c.h.b16 %v323
    %v1087 = vunpack.c.l.b16 %v324
    %v1088 = vunpack.c.h.b16 %v324
    %v1089 = vunpack.c.l.b16 %v325
    %v1090 = vunpack.c.h.b16 %v325
    %v1091 = vunpack.c.l.b16 %v326
    %v1092 = vunpack.c.h.b16 %v326
    %v1093 = vunpack.c.l.b16 %v327
    %v1094 = vunpack.c.h.b16 %v327
    %v1095 = vunpack.c.l.b16 %v328
    %v1096 = vunpack.c.h.b16 %v328
    %v1097 = vunpack.c.l.b16 %v329
    %v1098 = vunpack.c.h.b16 %v329
    %v1099 = vunpack.c.l.b16 %v330
    %v1100 = vunpack.c.h.b16 %v330
    %v1101 = vunpack.c.l.b16 %v331
    %v1102 = vunpack.c.h.b16 %v331
    %v1103 = vunpack.c.l.b16 %v332
    %v1104 = vunpack.c.h.b16 %v332
    %v1105 = vunpack.c.l.b16 %v333
    %v1106 = vunpack.c.h.b16 %v333
    %v1107 = vunpack.c.l.b16 %v334
    %v1108 = vunpack.c.h.b16 %v334
    %v1109 = vunpack.c.l.b16 %v335
    %v1110 = vunpack.c.h.b16 %v335
    %v1111 = vunpack.c.l.b16 %v336
    %v1112 = vunpack.c.h.b16 %v336
    %v1113 = vunpack.c.l.b16 %v337
    %v1114 = vunpack.c.h.b16 %v337
    %v1115 = vunpack.c.l.b16 %v338
    %v1116 = vunpack.c.h.b16 %v338
    %v1117 = vunpack.c.l.b16 %v339
    %v1118 = vunpack.c.h.b16 %v339
    %v1119 = vunpack.c.l.b16 %v340
    %v1120 = vunpack.c.h.b16 %v340
    %v1121 = vpack.c.b16 %v611, %v609
    %v1122 = vpack.c.b16 %v612, %v610
    %v1123 = vpack.c.b16 %v615, %v613
    %v1124 = vpack.c.b16 %v616, %v614
    %v1125 = vpack.c.b16 %v619, %v617
    %v1126 = vpack.c.b16 %v620, %v618
    %v1127 = vpack.c.b16 %v623, %v621
    %v1128 = vpack.c.b16 %v624, %v622
    %v1129 = vpack.c.b16 %v627, %v625
    %v1130 = vpack.c.b16 %v628, %v626
    %v1131 = vpack.c.b16 %v631, %v629
    %v1132 = vpack.c.b16 %v632, %v630
    %v1133 = vpack.c.b16 %v635, %v633
    %v1134 = vpack.c.b16 %v636, %v634
    %v1135 = vpack.c.b16 %v639, %v637
    %v1136 = vpack.c.b16 %v640, %v638
    %v1137 = vpack.c.b16 %v643, %v641
    %v1138 = vpack.c.b16 %v644, %v642
    %v1139 = vpack.c.b16 %v647, %v645
    %v1140 = vpack.c.b16 %v648, %v646
    %v1141 = vpack.c.b16 %v651, %v649
    %v1142 = vpack.c.b16 %v652, %v650
    %v1143 = vpack.c.b16 %v655, %v653
    %v1144 = vpack.c.b16 %v656, %v654
    %v1145 = vpack.c.b16 %v659, %v657
    %v1146 = vpack.c.b16 %v660, %v658
    %v1147 = vpack.c.b16 %v663, %v661
    %v1148 = vpack.c.b16 %v664, %v662
    %v1149 = vpack.c.b16 %v667, %v665
    %v1150 = vpack.c.b16 %v668, %v666
    %v1151 = vpack.c.b16 %v671, %v669
    %v1152 = vpack.c.b16 %v672, %v670
    %v1153 = vpack.c.b16 %v675, %v673
    %v1154 = vpack.c.b16 %v676, %v674
    %v1155 = vpack.c.b16 %v679, %v677
    %v1156 = vpack.c.b16 %v680, %v678
    %v1157 = vpack.c.b16 %v683, %v681
    %v1158 = vpack.c.b16 %v684, %v682
    %v1159 = vpack.c.b16 %v687, %v685
    %v1160 = vpack.c.b16 %v688, %v686
    %v1161 = vpack.c.b16 %v691, %v689
    %v1162 = vpack.c.b16 %v692, %v690
    %v1163 = vpack.c.b16 %v695, %v693
    %v1164 = vpack.c.b16 %v696, %v694
    %v1165 = vpack.c.b16 %v699, %v697
    %v1166 = vpack.c.b16 %v700, %v698
    %v1167 = vpack.c.b16 %v703, %v701
    %v1168 = vpack.c.b16 %v704, %v702
    %v1169 = vpack.c.b16 %v707, %v705
    %v1170 = vpack.c.b16 %v708, %v706
    %v1171 = vpack.c.b16 %v711, %v709
    %v1172 = vpack.c.b16 %v712, %v710
    %v1173 = vpack.c.b16 %v715, %v713
    %v1174 = vpack.c.b16 %v716, %v714
    %v1175 = vpack.c.b16 %v719, %v717
    %v1176 = vpack.c.b16 %v720, %v718
    %v1177 = vpack.c.b16 %v723, %v721
    %v1178 = vpack.c.b16 %v724, %v722
    %v1179 = vpack.c.b16 %v727, %v725
    %v1180 = vpack.c.b16 %v728, %v726
    %v1181 = vpack.c.b16 %v731, %v729
    %v1182 = vpack.c.b16 %v732, %v730
    %v1183 = vpack.c.b16 %v735, %v733
    %v1184 = vpack.c.b16 %v736, %v734
    %v1185 = vpack.c.b16 %v739, %v737
    %v1186 = vpack.c.b16 %v740, %v738
    %v1187 = vpack.c.b16 %v743, %v741
    %v1188 = vpack.c.b16 %v744, %v742
    %v1189 = vpack.c.b16 %v747, %v745
    %v1190 = vpack.c.b16 %v748, %v746
    %v1191 = vpack.c.b16 %v751, %v749
    %v1192 = vpack.c.b16 %v752, %v750
    %v1193 = vpack.c.b16 %v755, %v753
    %v1194 = vpack.c.b16 %v756, %v754
    %v1195 = vpack.c.b16 %v759, %v757
    %v1196 = vpack.c.b16 %v760, %v758
    %v1197 = vpack.c.b16 %v763, %v761
    %v1198 = vpack.c.b16 %v764, %v762
    %v1199 = vpack.c.b16 %v767, %v765
    %v1200 = vpack.c.b16 %v768, %v766
    %v1201 = vpack.c.b16 %v771, %v769
    %v1202 = vpack.c.b16 %v772, %v770
    %v1203 = vpack.c.b16 %v775, %v773
    %v1204 = vpack.c.b16 %v776, %v774
    %v1205 = vpack.c.b16 %v779, %v777
    %v1206 = vpack.c.b16 %v780, %v778
    %v1207 = vpack.c.b16 %v783, %v781
    %v1208 = vpack.c.b16 %v784, %v782
    %v1209 = vpack.c.b16 %v787, %v785
    %v1210 = vpack.c.b16 %v788, %v786
    %v1211 = vpack.c.b16 %v791, %v789
    %v1212 = vpack.c.b16 %v792, %v790
    %v1213 = vpack.c.b16 %v795, %v793
    %v1214 = vpack.c.b16 %v796, %v794
    %v1215 = vpack.c.b16 %v799, %v797
    %v1216 = vpack.c.b16 %v800, %v798
    %v1217 = vpack.c.b16 %v803, %v801
    %v1218 = vpack.c.b16 %v804, %v802
    %v1219 = vpack.c.b16 %v807, %v805
    %v1220 = vpack.c.b16 %v808, %v806
    %v1221 = vpack.c.b16 %v811, %v809
    %v1222 = vpack.c.b16 %v812, %v810
    %v1223 = vpack.c.b16 %v815, %v813
    %v1224 = vpack.c.b16 %v816, %v814
    %v1225 = vpack.c.b16 %v819, %v817
    %v1226 = vpack.c.b16 %v820, %v818
    %v1227 = vpack.c.b16 %v823, %v821
    %v1228 = vpack.c.b16 %v824, %v822
    %v1229 = vpack.c.b16 %v827, %v825
    %v1230 = vpack.c.b16 %v828, %v826
    %v1231 = vpack.c.b16 %v831, %v829
    %v1232 = vpack.c.b16 %v832, %v830
    %v1233 = vpack.c.b16 %v835, %v833
    %v1234 = vpack.c.b16 %v836, %v834
    %v1235 = vpack.c.b16 %v839, %v837
    %v1236 = vpack.c.b16 %v840, %v838
    %v1237 = vpack.c.b16 %v843, %v841
    %v1238 = vpack.c.b16 %v844, %v842
    %v1239 = vpack.c.b16 %v847, %v845
    %v1240 = vpack.c.b16 %v848, %v846
    %v1241 = vpack.c.b16 %v851, %v849
    %v1242 = vpack.c.b16 %v852, %v850
    %v1243 = vpack.c.b16 %v855, %v853
    %v1244 = vpack.c.b16 %v856, %v854
    %v1245 = vpack.c.b16 %v859, %v857
    %v1246 = vpack.c.b16 %v860, %v858
    %v1247 = vpack.c.b16 %v863, %v861
    %v1248 = vpack.c.b16 %v864, %v862
    %v1249 = vpack.c.b16 %v867, %v865
    %v1250 = vpack.c.b16 %v868, %v866
    %v1251 = vpack.c.b16 %v871, %v869
    %v1252 = vpack.c.b16 %v872, %v870
    %v1253 = vpack.c.b16 %v875, %v873
    %v1254 = vpack.c.b16 %v876, %v874
    %v1255 = vpack.c.b16 %v879, %v877
    %v1256 = vpack.c.b16 %v880, %v878
    %v1257 = vpack.c.b16 %v883, %v881
    %v1258 = vpack.c.b16 %v884, %v882
    %v1259 = vpack.c.b16 %v887, %v885
    %v1260 = vpack.c.b16 %v888, %v886
    %v1261 = vpack.c.b16 %v891, %v889
    %v1262 = vpack.c.b16 %v892, %v890
    %v1263 = vpack.c.b16 %v895, %v893
    %v1264 = vpack.c.b16 %v896, %v894
    %v1265 = vpack.c.b16 %v899, %v897
    %v1266 = vpack.c.b16 %v900, %v898
    %v1267 = vpack.c.b16 %v903, %v901
    %v1268 = vpack.c.b16 %v904, %v902
    %v1269 = vpack.c.b16 %v907, %v905
    %v1270 = vpack.c.b16 %v908, %v906
    %v1271 = vpack.c.b16 %v911, %v909
    %v1272 = vpack.c.b16 %v912, %v910
    %v1273 = vpack.c.b16 %v915, %v913
    %v1274 = vpack.c.b16 %v916, %v914
    %v1275 = vpack.c.b16 %v919, %v917
    %v1276 = vpack.c.b16 %v920, %v918
    %v1277 = vpack.c.b16 %v923, %v921
    %v1278 = vpack.c.b16 %v924, %v922
    %v1279 = vpack.c.b16 %v927, %v925
    %v1280 = vpack.c.b16 %v928, %v926
    %v1281 = vpack.c.b16 %v931, %v929
    %v1282 = vpack.c.b16 %v932, %v930
    %v1283 = vpack.c.b16 %v935, %v933
    %v1284 = vpack.c.b16 %v936, %v934
    %v1285 = vpack.c.b16 %v939, %v937
    %v1286 = vpack.c.b16 %v940, %v938
    %v1287 = vpack.c.b16 %v943, %v941
    %v1288 = vpack.c.b16 %v944, %v942
    %v1289 = vpack.c.b16 %v947, %v945
    %v1290 = vpack.c.b16 %v948, %v946
    %v1291 = vpack.c.b16 %v951, %v949
    %v1292 = vpack.c.b16 %v952, %v950
    %v1293 = vpack.c.b16 %v955, %v953
    %v1294 = vpack.c.b16 %v956, %v954
    %v1295 = vpack.c.b16 %v959, %v957
    %v1296 = vpack.c.b16 %v960, %v958
    %v1297 = vpack.c.b16 %v963, %v961
    %v1298 = vpack.c.b16 %v964, %v962
    %v1299 = vpack.c.b16 %v967, %v965
    %v1300 = vpack.c.b16 %v968, %v966
    %v1301 = vpack.c.b16 %v971, %v969
    %v1302 = vpack.c.b16 %v972, %v970
    %v1303 = vpack.c.b16 %v975, %v973
    %v1304 = vpack.c.b16 %v976, %v974
    %v1305 = vpack.c.b16 %v979, %v977
    %v1306 = vpack.c.b16 %v980, %v978
    %v1307 = vpack.c.b16 %v983, %v981
    %v1308 = vpack.c.b16 %v984, %v982
    %v1309 = vpack.c.b16 %v987, %v985
    %v1310 = vpack.c.b16 %v988, %v986
    %v1311 = vpack.c.b16 %v991, %v989
    %v1312 = vpack.c.b16 %v992, %v990
    %v1313 = vpack.c.b16 %v995, %v993
    %v1314 = vpack.c.b16 %v996, %v994
    %v1315 = vpack.c.b16 %v999, %v997
    %v1316 = vpack.c.b16 %v1000, %v998
    %v1317 = vpack.c.b16 %v1003, %v1001
    %v1318 = vpack.c.b16 %v1004, %v1002
    %v1319 = vpack.c.b16 %v1007, %v1005
    %v1320 = vpack.c.b16 %v1008, %v1006
    %v1321 = vpack.c.b16 %v1011, %v1009
    %v1322 = vpack.c.b16 %v1012, %v1010
    %v1323 = vpack.c.b16 %v1015, %v1013
    %v1324 = vpack.c.b16 %v1016, %v1014
    %v1325 = vpack.c.b16 %v1019, %v1017
    %v1326 = vpack.c.b16 %v1020, %v1018
    %v1327 = vpack.c.b16 %v1023, %v1021
    %v1328 = vpack.c.b16 %v1024, %v1022
    %v1329 = vpack.c.b16 %v1027, %v1025
    %v1330 = vpack.c.b16 %v1028, %v1026
    %v1331 = vpack.c.b16 %v1031, %v1029
    %v1332 = vpack.c.b16 %v1032, %v1030
    %v1333 = vpack.c.b16 %v1035, %v1033
    %v1334 = vpack.c.b16 %v1036, %v1034
    %v1335 = vpack.c.b16 %v1039, %v1037
    %v1336 = vpack.c.b16 %v1040, %v1038
    %v1337 = vpack.c.b16 %v1043, %v1041
    %v1338 = vpack.c.b16 %v1044, %v1042
    %v1339 = vpack.c.b16 %v1047, %v1045
    %v1340 = vpack.c.b16 %v1048, %v1046
    %v1341 = vpack.c.b16 %v1051, %v1049
    %v1342 = vpack.c.b16 %v1052, %v1050
    %v1343 = vpack.c.b16 %v1055, %v1053
    %v1344 = vpack.c.b16 %v1056, %v1054
    %v1345 = vpack.c.b16 %v1059, %v1057
    %v1346 = vpack.c.b16 %v1060, %v1058
    %v1347 = vpack.c.b16 %v1063, %v1061
    %v1348 = vpack.c.b16 %v1064, %v1062
    %v1349 = vpack.c.b16 %v1067, %v1065
    %v1350 = vpack.c.b16 %v1068, %v1066
    %v1351 = vpack.c.b16 %v1071, %v1069
    %v1352 = vpack.c.b16 %v1072, %v1070
    %v1353 = vpack.c.b16 %v1075, %v1073
    %v1354 = vpack.c.b16 %v1076, %v1074
    %v1355 = vpack.c.b16 %v1079, %v1077
    %v1356 = vpack.c.b16 %v1080, %v1078
    %v1357 = vpack.c.b16 %v1083, %v1081
    %v1358 = vpack.c.b16 %v1084, %v1082
    %v1359 = vpack.c.b16 %v1087, %v1085
    %v1360 = vpack.c.b16 %v1088, %v1086
    %v1361 = vpack.c.b16 %v1091, %v1089
    %v1362 = vpack.c.b16 %v1092, %v1090
    %v1363 = vpack.c.b16 %v1095, %v1093
    %v1364 = vpack.c.b16 %v1096, %v1094
    %v1365 = vpack.c.b16 %v1099, %v1097
    %v1366 = vpack.c.b16 %v1100, %v1098
    %v1367 = vpack.c.b16 %v1103, %v1101
    %v1368 = vpack.c.b16 %v1104, %v1102
    %v1369 = vpack.c.b16 %v1107, %v1105
    %v1370 = vpack.c.b16 %v1108, %v1106
    %v1371 = vpack.c.b16 %v1111, %v1109
    %v1372 = vpack.c.b16 %v1112, %v1110
    %v1373 = vpack.c.b16 %v1115, %v1113
    %v1374 = vpack.c.b16 %v1116, %v1114
    %v1375 = vpack.c.b16 %v1119, %v1117
    %v1376 = vpack.c.b16 %v1120, %v1118
    %1633 = vmatprep.subr.bf16.mxu0 %v1136
    %1634 = vmatpush1.bf16.msra.mxu0 %v1135
    %1635 = vmatprep.subr.bf16.mxu0 %v1134
    %1636 = vmatpush1.bf16.msra.mxu0 %v1133
    %1637 = vmatprep.subr.bf16.mxu0 %v1132
    %1638 = vmatpush1.bf16.msra.mxu0 %v1131
    %1639 = vmatprep.subr.bf16.mxu0 %v1130
    %1640 = vmatpush1.bf16.msra.mxu0 %v1129
    %1641 = vmatprep.subr.bf16.mxu0 %v1128
    %1642 = vmatpush1.bf16.msra.mxu0 %v1127
    %1643 = vmatprep.subr.bf16.mxu0 %v1126
    %1644 = vmatpush1.bf16.msra.mxu0 %v1125
    %1645 = vmatprep.subr.bf16.mxu0 %v1124
    %1646 = vmatpush1.bf16.msra.mxu0 %v1123
    %1647 = vmatprep.subr.bf16.mxu0 %v1122
    %1648 = vmatpush1.bf16.msra.mxu0 %v1121
    %1649 = vmatprep.subr.bf16.mxu0 %v1152
    %1650 = vmatpush2.bf16.msra.mxu0 %v1151
    %1651 = vmatprep.subr.bf16.mxu0 %v1150
    %1652 = vmatpush2.bf16.msra.mxu0 %v1149
    %1653 = vmatprep.subr.bf16.mxu0 %v1148
    %1654 = vmatpush2.bf16.msra.mxu0 %v1147
    %1655 = vmatprep.subr.bf16.mxu0 %v1146
    %1656 = vmatpush2.bf16.msra.mxu0 %v1145
    %1657 = vmatprep.subr.bf16.mxu0 %v1144
    %1658 = vmatpush2.bf16.msra.mxu0 %v1143
    %1659 = vmatprep.subr.bf16.mxu0 %v1142
    %1660 = vmatpush2.bf16.msra.mxu0 %v1141
    %1661 = vmatprep.subr.bf16.mxu0 %v1140
    %1662 = vmatpush2.bf16.msra.mxu0 %v1139
    %1663 = vmatprep.subr.bf16.mxu0 %v1138
    %1664 = vmatpush2.bf16.msra.mxu0 %v1137
    %1665 = vmatprep.mubr.bf16.mxu0 %v70
    %1666 = vmatmul.mubr.bf16.gmra.mxu0 %v69
    %v1667 = vpop.f32.mrf.mxu0
    %v1668 = vadd.f32 %v346, %v1667
    %v1669 = vpop.f32.mrf.mxu0
    %v1670 = vadd.f32 %v350, %v1669
    %v1671 = vpop.f32.mrf.mxu0
    %v1672 = vadd.f32 %v346, %v1671
    %v1673 = vpop.f32.mrf.mxu0
    %v1674 = vadd.f32 %v350, %v1673
    %1675 = vdwg.mxu0
    %1676 = vmatprep.subr.bf16.mxu0 %v1168
    %1677 = vmatpush1.bf16.msra.mxu0 %v1167
    %1678 = vmatprep.subr.bf16.mxu0 %v1166
    %1679 = vmatpush1.bf16.msra.mxu0 %v1165
    %1680 = vmatprep.subr.bf16.mxu0 %v1164
    %1681 = vmatpush1.bf16.msra.mxu0 %v1163
    %1682 = vmatprep.subr.bf16.mxu0 %v1162
    %1683 = vmatpush1.bf16.msra.mxu0 %v1161
    %1684 = vmatprep.subr.bf16.mxu0 %v1160
    %1685 = vmatpush1.bf16.msra.mxu0 %v1159
    %1686 = vmatprep.subr.bf16.mxu0 %v1158
    %1687 = vmatpush1.bf16.msra.mxu0 %v1157
    %1688 = vmatprep.subr.bf16.mxu0 %v1156
    %1689 = vmatpush1.bf16.msra.mxu0 %v1155
    %1690 = vmatprep.subr.bf16.mxu0 %v1154
    %1691 = vmatpush1.bf16.msra.mxu0 %v1153
    %1692 = vmatprep.subr.bf16.mxu0 %v1184
    %1693 = vmatpush2.bf16.msra.mxu0 %v1183
    %1694 = vmatprep.subr.bf16.mxu0 %v1182
    %1695 = vmatpush2.bf16.msra.mxu0 %v1181
    %1696 = vmatprep.subr.bf16.mxu0 %v1180
    %1697 = vmatpush2.bf16.msra.mxu0 %v1179
    %1698 = vmatprep.subr.bf16.mxu0 %v1178
    %1699 = vmatpush2.bf16.msra.mxu0 %v1177
    %1700 = vmatprep.subr.bf16.mxu0 %v1176
    %1701 = vmatpush2.bf16.msra.mxu0 %v1175
    %1702 = vmatprep.subr.bf16.mxu0 %v1174
    %1703 = vmatpush2.bf16.msra.mxu0 %v1173
    %1704 = vmatprep.subr.bf16.mxu0 %v1172
    %1705 = vmatpush2.bf16.msra.mxu0 %v1171
    %1706 = vmatprep.subr.bf16.mxu0 %v1170
    %1707 = vmatpush2.bf16.msra.mxu0 %v1169
    %1708 = vmatprep.mubr.bf16.mxu0 %v72
    %1709 = vmatmul.mubr.bf16.gmra.mxu0 %v71
    %v1710 = vpop.f32.mrf.mxu0
    %v1711 = vadd.f32 %v1668, %v1710
    %v1712 = vpop.f32.mrf.mxu0
    %v1713 = vadd.f32 %v1670, %v1712
    %v1714 = vpop.f32.mrf.mxu0
    %v1715 = vadd.f32 %v1672, %v1714
    %v1716 = vpop.f32.mrf.mxu0
    %v1717 = vadd.f32 %v1674, %v1716
    %1718 = vdwg.mxu0
    %1719 = vmatprep.subr.bf16.mxu0 %v1200
    %1720 = vmatpush1.bf16.msra.mxu0 %v1199
    %1721 = vmatprep.subr.bf16.mxu0 %v1198
    %1722 = vmatpush1.bf16.msra.mxu0 %v1197
    %1723 = vmatprep.subr.bf16.mxu0 %v1196
    %1724 = vmatpush1.bf16.msra.mxu0 %v1195
    %1725 = vmatprep.subr.bf16.mxu0 %v1194
    %1726 = vmatpush1.bf16.msra.mxu0 %v1193
    %1727 = vmatprep.subr.bf16.mxu0 %v1192
    %1728 = vmatpush1.bf16.msra.mxu0 %v1191
    %1729 = vmatprep.subr.bf16.mxu0 %v1190
    %1730 = vmatpush1.bf16.msra.mxu0 %v1189
    %1731 = vmatprep.subr.bf16.mxu0 %v1188
    %1732 = vmatpush1.bf16.msra.mxu0 %v1187
    %1733 = vmatprep.subr.bf16.mxu0 %v1186
    %1734 = vmatpush1.bf16.msra.mxu0 %v1185
    %1735 = vmatprep.subr.bf16.mxu0 %v1216
    %1736 = vmatpush2.bf16.msra.mxu0 %v1215
    %1737 = vmatprep.subr.bf16.mxu0 %v1214
    %1738 = vmatpush2.bf16.msra.mxu0 %v1213
    %1739 = vmatprep.subr.bf16.mxu0 %v1212
    %1740 = vmatpush2.bf16.msra.mxu0 %v1211
    %1741 = vmatprep.subr.bf16.mxu0 %v1210
    %1742 = vmatpush2.bf16.msra.mxu0 %v1209
    %1743 = vmatprep.subr.bf16.mxu0 %v1208
    %1744 = vmatpush2.bf16.msra.mxu0 %v1207
    %1745 = vmatprep.subr.bf16.mxu0 %v1206
    %1746 = vmatpush2.bf16.msra.mxu0 %v1205
    %1747 = vmatprep.subr.bf16.mxu0 %v1204
    %1748 = vmatpush2.bf16.msra.mxu0 %v1203
    %1749 = vmatprep.subr.bf16.mxu0 %v1202
    %1750 = vmatpush2.bf16.msra.mxu0 %v1201
    %1751 = vmatprep.mubr.bf16.mxu0 %v74
    %1752 = vmatmul.mubr.bf16.gmra.mxu0 %v73
    %v1753 = vpop.f32.mrf.mxu0
    %v1754 = vadd.f32 %v1711, %v1753
    %v1755 = vpop.f32.mrf.mxu0
    %v1756 = vadd.f32 %v1713, %v1755
    %v1757 = vpop.f32.mrf.mxu0
    %v1758 = vadd.f32 %v1715, %v1757
    %v1759 = vpop.f32.mrf.mxu0
    %v1760 = vadd.f32 %v1717, %v1759
    %1761 = vdwg.mxu0
    %1762 = vmatprep.subr.bf16.mxu0 %v1232
    %1763 = vmatpush1.bf16.msra.mxu0 %v1231
    %1764 = vmatprep.subr.bf16.mxu0 %v1230
    %1765 = vmatpush1.bf16.msra.mxu0 %v1229
    %1766 = vmatprep.subr.bf16.mxu0 %v1228
    %1767 = vmatpush1.bf16.msra.mxu0 %v1227
    %1768 = vmatprep.subr.bf16.mxu0 %v1226
    %1769 = vmatpush1.bf16.msra.mxu0 %v1225
    %1770 = vmatprep.subr.bf16.mxu0 %v1224
    %1771 = vmatpush1.bf16.msra.mxu0 %v1223
    %1772 = vmatprep.subr.bf16.mxu0 %v1222
    %1773 = vmatpush1.bf16.msra.mxu0 %v1221
    %1774 = vmatprep.subr.bf16.mxu0 %v1220
    %1775 = vmatpush1.bf16.msra.mxu0 %v1219
    %1776 = vmatprep.subr.bf16.mxu0 %v1218
    %1777 = vmatpush1.bf16.msra.mxu0 %v1217
    %1778 = vmatprep.subr.bf16.mxu0 %v1248
    %1779 = vmatpush2.bf16.msra.mxu0 %v1247
    %1780 = vmatprep.subr.bf16.mxu0 %v1246
    %1781 = vmatpush2.bf16.msra.mxu0 %v1245
    %1782 = vmatprep.subr.bf16.mxu0 %v1244
    %1783 = vmatpush2.bf16.msra.mxu0 %v1243
    %1784 = vmatprep.subr.bf16.mxu0 %v1242
    %1785 = vmatpush2.bf16.msra.mxu0 %v1241
    %1786 = vmatprep.subr.bf16.mxu0 %v1240
    %1787 = vmatpush2.bf16.msra.mxu0 %v1239
    %1788 = vmatprep.subr.bf16.mxu0 %v1238
    %1789 = vmatpush2.bf16.msra.mxu0 %v1237
    %1790 = vmatprep.subr.bf16.mxu0 %v1236
    %1791 = vmatpush2.bf16.msra.mxu0 %v1235
    %1792 = vmatprep.subr.bf16.mxu0 %v1234
    %1793 = vmatpush2.bf16.msra.mxu0 %v1233
    %1794 = vmatprep.mubr.bf16.mxu0 %v76
    %1795 = vmatmul.mubr.bf16.gmra.mxu0 %v75
    %v1796 = vpop.f32.mrf.mxu0
    %v1797 = vadd.f32 %v1754, %v1796
    %v1798 = vpop.f32.mrf.mxu0
    %v1799 = vadd.f32 %v1756, %v1798
    %v1800 = vpop.f32.mrf.mxu0
    %v1801 = vadd.f32 %v1758, %v1800
    %v1802 = vpop.f32.mrf.mxu0
    %v1803 = vadd.f32 %v1760, %v1802
    %1804 = vdwg.mxu0
    %1805 = vmatprep.subr.bf16.mxu0 %v1264
    %1806 = vmatpush1.bf16.msra.mxu0 %v1263
    %1807 = vmatprep.subr.bf16.mxu0 %v1262
    %1808 = vmatpush1.bf16.msra.mxu0 %v1261
    %1809 = vmatprep.subr.bf16.mxu0 %v1260
    %1810 = vmatpush1.bf16.msra.mxu0 %v1259
    %1811 = vmatprep.subr.bf16.mxu0 %v1258
    %1812 = vmatpush1.bf16.msra.mxu0 %v1257
    %1813 = vmatprep.subr.bf16.mxu0 %v1256
    %1814 = vmatpush1.bf16.msra.mxu0 %v1255
    %1815 = vmatprep.subr.bf16.mxu0 %v1254
    %1816 = vmatpush1.bf16.msra.mxu0 %v1253
    %1817 = vmatprep.subr.bf16.mxu0 %v1252
    %1818 = vmatpush1.bf16.msra.mxu0 %v1251
    %1819 = vmatprep.subr.bf16.mxu0 %v1250
    %1820 = vmatpush1.bf16.msra.mxu0 %v1249
    %1821 = vmatprep.subr.bf16.mxu0 %v1280
    %1822 = vmatpush2.bf16.msra.mxu0 %v1279
    %1823 = vmatprep.subr.bf16.mxu0 %v1278
    %1824 = vmatpush2.bf16.msra.mxu0 %v1277
    %1825 = vmatprep.subr.bf16.mxu0 %v1276
    %1826 = vmatpush2.bf16.msra.mxu0 %v1275
    %1827 = vmatprep.subr.bf16.mxu0 %v1274
    %1828 = vmatpush2.bf16.msra.mxu0 %v1273
    %1829 = vmatprep.subr.bf16.mxu0 %v1272
    %1830 = vmatpush2.bf16.msra.mxu0 %v1271
    %1831 = vmatprep.subr.bf16.mxu0 %v1270
    %1832 = vmatpush2.bf16.msra.mxu0 %v1269
    %1833 = vmatprep.subr.bf16.mxu0 %v1268
    %1834 = vmatpush2.bf16.msra.mxu0 %v1267
    %1835 = vmatprep.subr.bf16.mxu0 %v1266
    %1836 = vmatpush2.bf16.msra.mxu0 %v1265
    %1837 = vmatprep.mubr.bf16.mxu0 %v78
    %1838 = vmatmul.mubr.bf16.gmra.mxu0 %v77
    %v1839 = vpop.f32.mrf.mxu0
    %v1840 = vadd.f32 %v1797, %v1839
    %v1841 = vpop.f32.mrf.mxu0
    %v1842 = vadd.f32 %v1799, %v1841
    %v1843 = vpop.f32.mrf.mxu0
    %v1844 = vadd.f32 %v1801, %v1843
    %v1845 = vpop.f32.mrf.mxu0
    %v1846 = vadd.f32 %v1803, %v1845
    %1847 = vdwg.mxu0
    %1848 = vmatprep.subr.bf16.mxu0 %v1296
    %1849 = vmatpush1.bf16.msra.mxu0 %v1295
    %1850 = vmatprep.subr.bf16.mxu0 %v1294
    %1851 = vmatpush1.bf16.msra.mxu0 %v1293
    %1852 = vmatprep.subr.bf16.mxu0 %v1292
    %1853 = vmatpush1.bf16.msra.mxu0 %v1291
    %1854 = vmatprep.subr.bf16.mxu0 %v1290
    %1855 = vmatpush1.bf16.msra.mxu0 %v1289
    %1856 = vmatprep.subr.bf16.mxu0 %v1288
    %1857 = vmatpush1.bf16.msra.mxu0 %v1287
    %1858 = vmatprep.subr.bf16.mxu0 %v1286
    %1859 = vmatpush1.bf16.msra.mxu0 %v1285
    %1860 = vmatprep.subr.bf16.mxu0 %v1284
    %1861 = vmatpush1.bf16.msra.mxu0 %v1283
    %1862 = vmatprep.subr.bf16.mxu0 %v1282
    %1863 = vmatpush1.bf16.msra.mxu0 %v1281
    %1864 = vmatprep.subr.bf16.mxu0 %v1312
    %1865 = vmatpush2.bf16.msra.mxu0 %v1311
    %1866 = vmatprep.subr.bf16.mxu0 %v1310
    %1867 = vmatpush2.bf16.msra.mxu0 %v1309
    %1868 = vmatprep.subr.bf16.mxu0 %v1308
    %1869 = vmatpush2.bf16.msra.mxu0 %v1307
    %1870 = vmatprep.subr.bf16.mxu0 %v1306
    %1871 = vmatpush2.bf16.msra.mxu0 %v1305
    %1872 = vmatprep.subr.bf16.mxu0 %v1304
    %1873 = vmatpush2.bf16.msra.mxu0 %v1303
    %1874 = vmatprep.subr.bf16.mxu0 %v1302
    %1875 = vmatpush2.bf16.msra.mxu0 %v1301
    %1876 = vmatprep.subr.bf16.mxu0 %v1300
    %1877 = vmatpush2.bf16.msra.mxu0 %v1299
    %1878 = vmatprep.subr.bf16.mxu0 %v1298
    %1879 = vmatpush2.bf16.msra.mxu0 %v1297
    %1880 = vmatprep.mubr.bf16.mxu0 %v80
    %1881 = vmatmul.mubr.bf16.gmra.mxu0 %v79
    %v1882 = vpop.f32.mrf.mxu0
    %v1883 = vadd.f32 %v1840, %v1882
    %v1884 = vpop.f32.mrf.mxu0
    %v1885 = vadd.f32 %v1842, %v1884
    %v1886 = vpop.f32.mrf.mxu0
    %v1887 = vadd.f32 %v1844, %v1886
    %v1888 = vpop.f32.mrf.mxu0
    %v1889 = vadd.f32 %v1846, %v1888
    %1890 = vdwg.mxu0
    %1891 = vmatprep.subr.bf16.mxu0 %v1328
    %1892 = vmatpush1.bf16.msra.mxu0 %v1327
    %1893 = vmatprep.subr.bf16.mxu0 %v1326
    %1894 = vmatpush1.bf16.msra.mxu0 %v1325
    %1895 = vmatprep.subr.bf16.mxu0 %v1324
    %1896 = vmatpush1.bf16.msra.mxu0 %v1323
    %1897 = vmatprep.subr.bf16.mxu0 %v1322
    %1898 = vmatpush1.bf16.msra.mxu0 %v1321
    %1899 = vmatprep.subr.bf16.mxu0 %v1320
    %1900 = vmatpush1.bf16.msra.mxu0 %v1319
    %1901 = vmatprep.subr.bf16.mxu0 %v1318
    %1902 = vmatpush1.bf16.msra.mxu0 %v1317
    %1903 = vmatprep.subr.bf16.mxu0 %v1316
    %1904 = vmatpush1.bf16.msra.mxu0 %v1315
    %1905 = vmatprep.subr.bf16.mxu0 %v1314
    %1906 = vmatpush1.bf16.msra.mxu0 %v1313
    %1907 = vmatprep.subr.bf16.mxu0 %v1344
    %1908 = vmatpush2.bf16.msra.mxu0 %v1343
    %1909 = vmatprep.subr.bf16.mxu0 %v1342
    %1910 = vmatpush2.bf16.msra.mxu0 %v1341
    %1911 = vmatprep.subr.bf16.mxu0 %v1340
    %1912 = vmatpush2.bf16.msra.mxu0 %v1339
    %1913 = vmatprep.subr.bf16.mxu0 %v1338
    %1914 = vmatpush2.bf16.msra.mxu0 %v1337
    %1915 = vmatprep.subr.bf16.mxu0 %v1336
    %1916 = vmatpush2.bf16.msra.mxu0 %v1335
    %1917 = vmatprep.subr.bf16.mxu0 %v1334
    %1918 = vmatpush2.bf16.msra.mxu0 %v1333
    %1919 = vmatprep.subr.bf16.mxu0 %v1332
    %1920 = vmatpush2.bf16.msra.mxu0 %v1331
    %1921 = vmatprep.subr.bf16.mxu0 %v1330
    %1922 = vmatpush2.bf16.msra.mxu0 %v1329
    %1923 = vmatprep.mubr.bf16.mxu0 %v82
    %1924 = vmatmul.mubr.bf16.gmra.mxu0 %v81
    %v1925 = vpop.f32.mrf.mxu0
    %v1926 = vadd.f32 %v1883, %v1925
    %v1927 = vpop.f32.mrf.mxu0
    %v1928 = vadd.f32 %v1885, %v1927
    %v1929 = vpop.f32.mrf.mxu0
    %v1930 = vadd.f32 %v1887, %v1929
    %v1931 = vpop.f32.mrf.mxu0
    %v1932 = vadd.f32 %v1889, %v1931
    %1933 = vdwg.mxu0
    %1934 = vmatprep.subr.bf16.mxu0 %v1360
    %1935 = vmatpush1.bf16.msra.mxu0 %v1359
    %1936 = vmatprep.subr.bf16.mxu0 %v1358
    %1937 = vmatpush1.bf16.msra.mxu0 %v1357
    %1938 = vmatprep.subr.bf16.mxu0 %v1356
    %1939 = vmatpush1.bf16.msra.mxu0 %v1355
    %1940 = vmatprep.subr.bf16.mxu0 %v1354
    %1941 = vmatpush1.bf16.msra.mxu0 %v1353
    %1942 = vmatprep.subr.bf16.mxu0 %v1352
    %1943 = vmatpush1.bf16.msra.mxu0 %v1351
    %1944 = vmatprep.subr.bf16.mxu0 %v1350
    %1945 = vmatpush1.bf16.msra.mxu0 %v1349
    %1946 = vmatprep.subr.bf16.mxu0 %v1348
    %1947 = vmatpush1.bf16.msra.mxu0 %v1347
    %1948 = vmatprep.subr.bf16.mxu0 %v1346
    %1949 = vmatpush1.bf16.msra.mxu0 %v1345
    %1950 = vmatprep.subr.bf16.mxu0 %v1376
    %1951 = vmatpush2.bf16.msra.mxu0 %v1375
    %1952 = vmatprep.subr.bf16.mxu0 %v1374
    %1953 = vmatpush2.bf16.msra.mxu0 %v1373
    %1954 = vmatprep.subr.bf16.mxu0 %v1372
    %1955 = vmatpush2.bf16.msra.mxu0 %v1371
    %1956 = vmatprep.subr.bf16.mxu0 %v1370
    %1957 = vmatpush2.bf16.msra.mxu0 %v1369
    %1958 = vmatprep.subr.bf16.mxu0 %v1368
    %1959 = vmatpush2.bf16.msra.mxu0 %v1367
    %1960 = vmatprep.subr.bf16.mxu0 %v1366
    %1961 = vmatpush2.bf16.msra.mxu0 %v1365
    %1962 = vmatprep.subr.bf16.mxu0 %v1364
    %1963 = vmatpush2.bf16.msra.mxu0 %v1363
    %1964 = vmatprep.subr.bf16.mxu0 %v1362
    %1965 = vmatpush2.bf16.msra.mxu0 %v1361
    %1966 = vmatprep.mubr.bf16.mxu0 %v84
    %1967 = vmatmul.mubr.bf16.gmra.mxu0 %v83
    %v1968 = vpop.f32.mrf.mxu0
    %v1969 = vadd.f32 %v1926, %v1968
    %v1970 = vpop.f32.mrf.mxu0
    %v1971 = vadd.f32 %v1928, %v1970
    %v1972 = vpop.f32.mrf.mxu0
    %v1973 = vadd.f32 %v1930, %v1972
    %v1974 = vpop.f32.mrf.mxu0
    %v1975 = vadd.f32 %v1932, %v1974
    %1976 = vdwg.mxu0
    %v1977 = vpack.c.bf16 %v1973, %v1969
    %v1978 = vpack.c.bf16 %v1975, %v1971
    %v1979 = vld [vmem:[%s3] sm:$0xff]
    %v1980 = vld [vmem:[%s3 + $0x8] sm:$0xff]
    %v1981 = vld [vmem:[%s3 + $0x10] sm:$0xff]
    %v1982 = vld [vmem:[%s3 + $0x18] sm:$0xff]
    %v1983 = vld [vmem:[%s3 + $0x20] sm:$0xff]
    %v1984 = vld [vmem:[%s3 + $0x28] sm:$0xff]
    %v1985 = vld [vmem:[%s3 + $0x30] sm:$0xff]
    %v1986 = vld [vmem:[%s3 + $0x38] sm:$0xff]
    %v1987 = vld [vmem:[%s3 + $0x40] sm:$0xff]
    %v1988 = vld [vmem:[%s3 + $0x48] sm:$0xff]
    %v1989 = vld [vmem:[%s3 + $0x50] sm:$0xff]
    %v1990 = vld [vmem:[%s3 + $0x58] sm:$0xff]
    %v1991 = vld [vmem:[%s3 + $0x60] sm:$0xff]
    %v1992 = vld [vmem:[%s3 + $0x68] sm:$0xff]
    %v1993 = vld [vmem:[%s3 + $0x70] sm:$0xff]
    %v1994 = vld [vmem:[%s3 + $0x78] sm:$0xff]
    %v1995 = vld [vmem:[%s3 + $0x80] sm:$0xff]
    %v1996 = vld [vmem:[%s3 + $0x88] sm:$0xff]
    %v1997 = vld [vmem:[%s3 + $0x90] sm:$0xff]
    %v1998 = vld [vmem:[%s3 + $0x98] sm:$0xff]
    %v1999 = vld [vmem:[%s3 + $0xa0] sm:$0xff]
    %v2000 = vld [vmem:[%s3 + $0xa8] sm:$0xff]
    %v2001 = vld [vmem:[%s3 + $0xb0] sm:$0xff]
    %v2002 = vld [vmem:[%s3 + $0xb8] sm:$0xff]
    %v2003 = vld [vmem:[%s3 + $0xc0] sm:$0xff]
    %v2004 = vld [vmem:[%s3 + $0xc8] sm:$0xff]
    %v2005 = vld [vmem:[%s3 + $0xd0] sm:$0xff]
    %v2006 = vld [vmem:[%s3 + $0xd8] sm:$0xff]
    %v2007 = vld [vmem:[%s3 + $0xe0] sm:$0xff]
    %v2008 = vld [vmem:[%s3 + $0xe8] sm:$0xff]
    %v2009 = vld [vmem:[%s3 + $0xf0] sm:$0xff]
    %v2010 = vld [vmem:[%s3 + $0xf8] sm:$0xff]
    %v2011 = vld [vmem:[%s4] sm:$0x3]
    %v2013 = vlaneseq
    %v2014 = vshrl.u32 %v2013, 7
    %v2015 = vsub.s32 0, %v2014
    %v2016 = vrot.slane %v2011, %v2015
    %v2017 = vlaneseq
    %v2018 = vshrl.u32 %v2017, 7
    %v2019 = vsub.s32 1, %v2018
    %v2020 = vrot.slane %v2011, %v2019
    %v2055 = vunpack.c.l.b16 %v1979
    %v2056 = vunpack.c.h.b16 %v1979
    %v2057 = vunpack.c.l.b16 %v1980
    %v2058 = vunpack.c.h.b16 %v1980
    %v2059 = vunpack.c.l.b16 %v1981
    %v2060 = vunpack.c.h.b16 %v1981
    %v2061 = vunpack.c.l.b16 %v1982
    %v2062 = vunpack.c.h.b16 %v1982
    %v2063 = vunpack.c.l.b16 %v1983
    %v2064 = vunpack.c.h.b16 %v1983
    %v2065 = vunpack.c.l.b16 %v1984
    %v2066 = vunpack.c.h.b16 %v1984
    %v2067 = vunpack.c.l.b16 %v1985
    %v2068 = vunpack.c.h.b16 %v1985
    %v2069 = vunpack.c.l.b16 %v1986
    %v2070 = vunpack.c.h.b16 %v1986
    %v2071 = vunpack.c.l.b16 %v1987
    %v2072 = vunpack.c.h.b16 %v1987
    %v2073 = vunpack.c.l.b16 %v1988
    %v2074 = vunpack.c.h.b16 %v1988
    %v2075 = vunpack.c.l.b16 %v1989
    %v2076 = vunpack.c.h.b16 %v1989
    %v2077 = vunpack.c.l.b16 %v1990
    %v2078 = vunpack.c.h.b16 %v1990
    %v2079 = vunpack.c.l.b16 %v1991
    %v2080 = vunpack.c.h.b16 %v1991
    %v2081 = vunpack.c.l.b16 %v1992
    %v2082 = vunpack.c.h.b16 %v1992
    %v2083 = vunpack.c.l.b16 %v1993
    %v2084 = vunpack.c.h.b16 %v1993
    %v2085 = vunpack.c.l.b16 %v1994
    %v2086 = vunpack.c.h.b16 %v1994
    %v2087 = vunpack.c.l.b16 %v1995
    %v2088 = vunpack.c.h.b16 %v1995
    %v2089 = vunpack.c.l.b16 %v1996
    %v2090 = vunpack.c.h.b16 %v1996
    %v2091 = vunpack.c.l.b16 %v1997
    %v2092 = vunpack.c.h.b16 %v1997
    %v2093 = vunpack.c.l.b16 %v1998
    %v2094 = vunpack.c.h.b16 %v1998
    %v2095 = vunpack.c.l.b16 %v1999
    %v2096 = vunpack.c.h.b16 %v1999
    %v2097 = vunpack.c.l.b16 %v2000
    %v2098 = vunpack.c.h.b16 %v2000
    %v2099 = vunpack.c.l.b16 %v2001
    %v2100 = vunpack.c.h.b16 %v2001
    %v2101 = vunpack.c.l.b16 %v2002
    %v2102 = vunpack.c.h.b16 %v2002
    %v2103 = vunpack.c.l.b16 %v2003
    %v2104 = vunpack.c.h.b16 %v2003
    %v2105 = vunpack.c.l.b16 %v2004
    %v2106 = vunpack.c.h.b16 %v2004
    %v2107 = vunpack.c.l.b16 %v2005
    %v2108 = vunpack.c.h.b16 %v2005
    %v2109 = vunpack.c.l.b16 %v2006
    %v2110 = vunpack.c.h.b16 %v2006
    %v2111 = vunpack.c.l.b16 %v2007
    %v2112 = vunpack.c.h.b16 %v2007
    %v2113 = vunpack.c.l.b16 %v2008
    %v2114 = vunpack.c.h.b16 %v2008
    %v2115 = vunpack.c.l.b16 %v2009
    %v2116 = vunpack.c.h.b16 %v2009
    %v2117 = vunpack.c.l.b16 %v2010
    %v2118 = vunpack.c.h.b16 %v2010
    %v2119 = vpack.c.b16 %v2057, %v2055
    %v2120 = vpack.c.b16 %v2058, %v2056
    %v2121 = vpack.c.b16 %v2061, %v2059
    %v2122 = vpack.c.b16 %v2062, %v2060
    %v2123 = vpack.c.b16 %v2065, %v2063
    %v2124 = vpack.c.b16 %v2066, %v2064
    %v2125 = vpack.c.b16 %v2069, %v2067
    %v2126 = vpack.c.b16 %v2070, %v2068
    %v2127 = vpack.c.b16 %v2073, %v2071
    %v2128 = vpack.c.b16 %v2074, %v2072
    %v2129 = vpack.c.b16 %v2077, %v2075
    %v2130 = vpack.c.b16 %v2078, %v2076
    %v2131 = vpack.c.b16 %v2081, %v2079
    %v2132 = vpack.c.b16 %v2082, %v2080
    %v2133 = vpack.c.b16 %v2085, %v2083
    %v2134 = vpack.c.b16 %v2086, %v2084
    %v2135 = vpack.c.b16 %v2089, %v2087
    %v2136 = vpack.c.b16 %v2090, %v2088
    %v2137 = vpack.c.b16 %v2093, %v2091
    %v2138 = vpack.c.b16 %v2094, %v2092
    %v2139 = vpack.c.b16 %v2097, %v2095
    %v2140 = vpack.c.b16 %v2098, %v2096
    %v2141 = vpack.c.b16 %v2101, %v2099
    %v2142 = vpack.c.b16 %v2102, %v2100
    %v2143 = vpack.c.b16 %v2105, %v2103
    %v2144 = vpack.c.b16 %v2106, %v2104
    %v2145 = vpack.c.b16 %v2109, %v2107
    %v2146 = vpack.c.b16 %v2110, %v2108
    %v2147 = vpack.c.b16 %v2113, %v2111
    %v2148 = vpack.c.b16 %v2114, %v2112
    %v2149 = vpack.c.b16 %v2117, %v2115
    %v2150 = vpack.c.b16 %v2118, %v2116
    %2183 = vmatprep.subr.bf16.mxu0 %v2134
    %2184 = vmatpush1.bf16.msra.mxu0 %v2133
    %2185 = vmatprep.subr.bf16.mxu0 %v2132
    %2186 = vmatpush1.bf16.msra.mxu0 %v2131
    %2187 = vmatprep.subr.bf16.mxu0 %v2130
    %2188 = vmatpush1.bf16.msra.mxu0 %v2129
    %2189 = vmatprep.subr.bf16.mxu0 %v2128
    %2190 = vmatpush1.bf16.msra.mxu0 %v2127
    %2191 = vmatprep.subr.bf16.mxu0 %v2126
    %2192 = vmatpush1.bf16.msra.mxu0 %v2125
    %2193 = vmatprep.subr.bf16.mxu0 %v2124
    %2194 = vmatpush1.bf16.msra.mxu0 %v2123
    %2195 = vmatprep.subr.bf16.mxu0 %v2122
    %2196 = vmatpush1.bf16.msra.mxu0 %v2121
    %2197 = vmatprep.subr.bf16.mxu0 %v2120
    %2198 = vmatpush1.bf16.msra.mxu0 %v2119
    %2199 = vmatprep.subr.bf16.mxu0 %v2150
    %2200 = vmatpush2.bf16.msra.mxu0 %v2149
    %2201 = vmatprep.subr.bf16.mxu0 %v2148
    %2202 = vmatpush2.bf16.msra.mxu0 %v2147
    %2203 = vmatprep.subr.bf16.mxu0 %v2146
    %2204 = vmatpush2.bf16.msra.mxu0 %v2145
    %2205 = vmatprep.subr.bf16.mxu0 %v2144
    %2206 = vmatpush2.bf16.msra.mxu0 %v2143
    %2207 = vmatprep.subr.bf16.mxu0 %v2142
    %2208 = vmatpush2.bf16.msra.mxu0 %v2141
    %2209 = vmatprep.subr.bf16.mxu0 %v2140
    %2210 = vmatpush2.bf16.msra.mxu0 %v2139
    %2211 = vmatprep.subr.bf16.mxu0 %v2138
    %2212 = vmatpush2.bf16.msra.mxu0 %v2137
    %2213 = vmatprep.subr.bf16.mxu0 %v2136
    %2214 = vmatpush2.bf16.msra.mxu0 %v2135
    %2215 = vmatprep.mubr.bf16.mxu0 %v1978
    %2216 = vmatmul.mubr.bf16.gmra.mxu0 %v1977
    %v2217 = vpop.f32.mrf.mxu0
    %v2218 = vadd.f32 %v2016, %v2217
    %v2219 = vpop.f32.mrf.mxu0
    %v2220 = vadd.f32 %v2020, %v2219
    %v2221 = vpop.f32.mrf.mxu0
    %v2222 = vadd.f32 %v2016, %v2221
    %v2223 = vpop.f32.mrf.mxu0
    %v2224 = vadd.f32 %v2020, %v2223
    %2225 = vdwg.mxu0
    %v2226 = vtanh.pop %v2218
    %v2227 = vtanh.pop %v2220
    %v2228 = vtanh.pop %v2222
    %v2229 = vtanh.pop %v2224
    %v2230 = vld [vmem:[%s5] sm:$0xff]
    %v2231 = vld [vmem:[%s5 + $0x8] sm:$0xff]
    %v2232 = vld [vmem:[%s5 + $0x10] sm:$0xff]
    %v2233 = vld [vmem:[%s5 + $0x18] sm:$0xff]
    %v2234 = vld [vmem:[%s5 + $0x20] sm:$0xff]
    %v2235 = vld [vmem:[%s5 + $0x28] sm:$0xff]
    %v2236 = vld [vmem:[%s5 + $0x30] sm:$0xff]
    %v2237 = vld [vmem:[%s5 + $0x38] sm:$0xff]
    %v2238 = vld [vmem:[%s5 + $0x40] sm:$0xff]
    %v2239 = vld [vmem:[%s5 + $0x48] sm:$0xff]
    %v2240 = vld [vmem:[%s5 + $0x50] sm:$0xff]
    %v2241 = vld [vmem:[%s5 + $0x58] sm:$0xff]
    %v2242 = vld [vmem:[%s5 + $0x60] sm:$0xff]
    %v2243 = vld [vmem:[%s5 + $0x68] sm:$0xff]
    %v2244 = vld [vmem:[%s5 + $0x70] sm:$0xff]
    %v2245 = vld [vmem:[%s5 + $0x78] sm:$0xff]
    %v2246 = vld [vmem:[%s5 + $0x80] sm:$0xff]
    %v2247 = vld [vmem:[%s5 + $0x88] sm:$0xff]
    %v2248 = vld [vmem:[%s5 + $0x90] sm:$0xff]
    %v2249 = vld [vmem:[%s5 + $0x98] sm:$0xff]
    %v2250 = vld [vmem:[%s5 + $0xa0] sm:$0xff]
    %v2251 = vld [vmem:[%s5 + $0xa8] sm:$0xff]
    %v2252 = vld [vmem:[%s5 + $0xb0] sm:$0xff]
    %v2253 = vld [vmem:[%s5 + $0xb8] sm:$0xff]
    %v2254 = vld [vmem:[%s5 + $0xc0] sm:$0xff]
    %v2255 = vld [vmem:[%s5 + $0xc8] sm:$0xff]
    %v2256 = vld [vmem:[%s5 + $0xd0] sm:$0xff]
    %v2257 = vld [vmem:[%s5 + $0xd8] sm:$0xff]
    %v2258 = vld [vmem:[%s5 + $0xe0] sm:$0xff]
    %v2259 = vld [vmem:[%s5 + $0xe8] sm:$0xff]
    %v2260 = vld [vmem:[%s5 + $0xf0] sm:$0xff]
    %v2261 = vld [vmem:[%s5 + $0xf8] sm:$0xff]
    %v2262 = vld [vmem:[%s6] sm:$0x3]
    %v2264 = vlaneseq
    %v2265 = vshrl.u32 %v2264, 7
    %v2266 = vsub.s32 0, %v2265
    %v2267 = vrot.slane %v2262, %v2266
    %v2268 = vlaneseq
    %v2269 = vshrl.u32 %v2268, 7
    %v2270 = vsub.s32 1, %v2269
    %v2271 = vrot.slane %v2262, %v2270
    %v2306 = vunpack.c.l.b16 %v2230
    %v2307 = vunpack.c.h.b16 %v2230
    %v2308 = vunpack.c.l.b16 %v2231
    %v2309 = vunpack.c.h.b16 %v2231
    %v2310 = vunpack.c.l.b16 %v2232
    %v2311 = vunpack.c.h.b16 %v2232
    %v2312 = vunpack.c.l.b16 %v2233
    %v2313 = vunpack.c.h.b16 %v2233
    %v2314 = vunpack.c.l.b16 %v2234
    %v2315 = vunpack.c.h.b16 %v2234
    %v2316 = vunpack.c.l.b16 %v2235
    %v2317 = vunpack.c.h.b16 %v2235
    %v2318 = vunpack.c.l.b16 %v2236
    %v2319 = vunpack.c.h.b16 %v2236
    %v2320 = vunpack.c.l.b16 %v2237
    %v2321 = vunpack.c.h.b16 %v2237
    %v2322 = vunpack.c.l.b16 %v2238
    %v2323 = vunpack.c.h.b16 %v2238
    %v2324 = vunpack.c.l.b16 %v2239
    %v2325 = vunpack.c.h.b16 %v2239
    %v2326 = vunpack.c.l.b16 %v2240
    %v2327 = vunpack.c.h.b16 %v2240
    %v2328 = vunpack.c.l.b16 %v2241
    %v2329 = vunpack.c.h.b16 %v2241
    %v2330 = vunpack.c.l.b16 %v2242
    %v2331 = vunpack.c.h.b16 %v2242
    %v2332 = vunpack.c.l.b16 %v2243
    %v2333 = vunpack.c.h.b16 %v2243
    %v2334 = vunpack.c.l.b16 %v2244
    %v2335 = vunpack.c.h.b16 %v2244
    %v2336 = vunpack.c.l.b16 %v2245
    %v2337 = vunpack.c.h.b16 %v2245
    %v2338 = vunpack.c.l.b16 %v2246
    %v2339 = vunpack.c.h.b16 %v2246
    %v2340 = vunpack.c.l.b16 %v2247
    %v2341 = vunpack.c.h.b16 %v2247
    %v2342 = vunpack.c.l.b16 %v2248
    %v2343 = vunpack.c.h.b16 %v2248
    %v2344 = vunpack.c.l.b16 %v2249
    %v2345 = vunpack.c.h.b16 %v2249
    %v2346 = vunpack.c.l.b16 %v2250
    %v2347 = vunpack.c.h.b16 %v2250
    %v2348 = vunpack.c.l.b16 %v2251
    %v2349 = vunpack.c.h.b16 %v2251
    %v2350 = vunpack.c.l.b16 %v2252
    %v2351 = vunpack.c.h.b16 %v2252
    %v2352 = vunpack.c.l.b16 %v2253
    %v2353 = vunpack.c.h.b16 %v2253
    %v2354 = vunpack.c.l.b16 %v2254
    %v2355 = vunpack.c.h.b16 %v2254
    %v2356 = vunpack.c.l.b16 %v2255
    %v2357 = vunpack.c.h.b16 %v2255
    %v2358 = vunpack.c.l.b16 %v2256
    %v2359 = vunpack.c.h.b16 %v2256
    %v2360 = vunpack.c.l.b16 %v2257
    %v2361 = vunpack.c.h.b16 %v2257
    %v2362 = vunpack.c.l.b16 %v2258
    %v2363 = vunpack.c.h.b16 %v2258
    %v2364 = vunpack.c.l.b16 %v2259
    %v2365 = vunpack.c.h.b16 %v2259
    %v2366 = vunpack.c.l.b16 %v2260
    %v2367 = vunpack.c.h.b16 %v2260
    %v2368 = vunpack.c.l.b16 %v2261
    %v2369 = vunpack.c.h.b16 %v2261
    %v2370 = vpack.c.b16 %v2308, %v2306
    %v2371 = vpack.c.b16 %v2309, %v2307
    %v2372 = vpack.c.b16 %v2312, %v2310
    %v2373 = vpack.c.b16 %v2313, %v2311
    %v2374 = vpack.c.b16 %v2316, %v2314
    %v2375 = vpack.c.b16 %v2317, %v2315
    %v2376 = vpack.c.b16 %v2320, %v2318
    %v2377 = vpack.c.b16 %v2321, %v2319
    %v2378 = vpack.c.b16 %v2324, %v2322
    %v2379 = vpack.c.b16 %v2325, %v2323
    %v2380 = vpack.c.b16 %v2328, %v2326
    %v2381 = vpack.c.b16 %v2329, %v2327
    %v2382 = vpack.c.b16 %v2332, %v2330
    %v2383 = vpack.c.b16 %v2333, %v2331
    %v2384 = vpack.c.b16 %v2336, %v2334
    %v2385 = vpack.c.b16 %v2337, %v2335
    %v2386 = vpack.c.b16 %v2340, %v2338
    %v2387 = vpack.c.b16 %v2341, %v2339
    %v2388 = vpack.c.b16 %v2344, %v2342
    %v2389 = vpack.c.b16 %v2345, %v2343
    %v2390 = vpack.c.b16 %v2348, %v2346
    %v2391 = vpack.c.b16 %v2349, %v2347
    %v2392 = vpack.c.b16 %v2352, %v2350
    %v2393 = vpack.c.b16 %v2353, %v2351
    %v2394 = vpack.c.b16 %v2356, %v2354
    %v2395 = vpack.c.b16 %v2357, %v2355
    %v2396 = vpack.c.b16 %v2360, %v2358
    %v2397 = vpack.c.b16 %v2361, %v2359
    %v2398 = vpack.c.b16 %v2364, %v2362
    %v2399 = vpack.c.b16 %v2365, %v2363
    %v2400 = vpack.c.b16 %v2368, %v2366
    %v2401 = vpack.c.b16 %v2369, %v2367
    %2434 = vmatprep.subr.bf16.mxu0 %v2385
    %2435 = vmatpush1.bf16.msra.mxu0 %v2384
    %2436 = vmatprep.subr.bf16.mxu0 %v2383
    %2437 = vmatpush1.bf16.msra.mxu0 %v2382
    %2438 = vmatprep.subr.bf16.mxu0 %v2381
    %2439 = vmatpush1.bf16.msra.mxu0 %v2380
    %2440 = vmatprep.subr.bf16.mxu0 %v2379
    %2441 = vmatpush1.bf16.msra.mxu0 %v2378
    %2442 = vmatprep.subr.bf16.mxu0 %v2377
    %2443 = vmatpush1.bf16.msra.mxu0 %v2376
    %2444 = vmatprep.subr.bf16.mxu0 %v2375
    %2445 = vmatpush1.bf16.msra.mxu0 %v2374
    %2446 = vmatprep.subr.bf16.mxu0 %v2373
    %2447 = vmatpush1.bf16.msra.mxu0 %v2372
    %2448 = vmatprep.subr.bf16.mxu0 %v2371
    %2449 = vmatpush1.bf16.msra.mxu0 %v2370
    %2450 = vmatprep.subr.bf16.mxu0 %v2401
    %2451 = vmatpush2.bf16.msra.mxu0 %v2400
    %2452 = vmatprep.subr.bf16.mxu0 %v2399
    %2453 = vmatpush2.bf16.msra.mxu0 %v2398
    %2454 = vmatprep.subr.bf16.mxu0 %v2397
    %2455 = vmatpush2.bf16.msra.mxu0 %v2396
    %2456 = vmatprep.subr.bf16.mxu0 %v2395
    %2457 = vmatpush2.bf16.msra.mxu0 %v2394
    %2458 = vmatprep.subr.bf16.mxu0 %v2393
    %2459 = vmatpush2.bf16.msra.mxu0 %v2392
    %2460 = vmatprep.subr.bf16.mxu0 %v2391
    %2461 = vmatpush2.bf16.msra.mxu0 %v2390
    %2462 = vmatprep.subr.bf16.mxu0 %v2389
    %2463 = vmatpush2.bf16.msra.mxu0 %v2388
    %2464 = vmatprep.subr.bf16.mxu0 %v2387
    %2465 = vmatpush2.bf16.msra.mxu0 %v2386
    %2466 = vmatprep.mubr.bf16.mxu0 %v1978
    %2467 = vmatmul.mubr.bf16.gmra.mxu0 %v1977
    %v2468 = vpop.f32.mrf.mxu0
    %v2469 = vadd.f32 %v2267, %v2468
    %v2470 = vpop.f32.mrf.mxu0
    %v2471 = vadd.f32 %v2271, %v2470
    %v2472 = vpop.f32.mrf.mxu0
    %v2473 = vadd.f32 %v2267, %v2472
    %v2474 = vpop.f32.mrf.mxu0
    %v2475 = vadd.f32 %v2271, %v2474
    %2476 = vdwg.mxu0
    %v2477 = vxor.u32 %v2469, 2147483648
    %v2478 = vxor.u32 %v2471, 2147483648
    %v2479 = vxor.u32 %v2473, 2147483648
    %v2480 = vxor.u32 %v2475, 2147483648
    %v2481 = vmul.f32 %v2477, 1.442695
    %v2482 = vpow.pop %v2481
    %v2483 = vmul.f32 %v2478, 1.442695
    %v2484 = vpow.pop %v2483
    %v2485 = vmul.f32 %v2479, 1.442695
    %v2486 = vpow.pop %v2485
    %v2487 = vmul.f32 %v2480, 1.442695
    %v2488 = vpow.pop %v2487
    %v2489 = vadd.f32 %v2482, 1.0
    %v2490 = vadd.f32 %v2484, 1.0
    %v2491 = vadd.f32 %v2486, 1.0
    %v2492 = vadd.f32 %v2488, 1.0
    %v2493 = vrcp.pop %v2489
    %v2494 = vmul.f32 1.0, %v2493
    %v2495 = vrcp.pop %v2490
    %v2496 = vmul.f32 1.0, %v2495
    %v2497 = vrcp.pop %v2491
    %v2498 = vmul.f32 1.0, %v2497
    %v2499 = vrcp.pop %v2492
    %v2500 = vmul.f32 1.0, %v2499
    %v2501 = vmul.f32 %v2226, %v2494
    %v2502 = vmul.f32 %v2227, %v2496
    %v2503 = vmul.f32 %v2228, %v2498
    %v2504 = vmul.f32 %v2229, %v2500
    %v2505 = vld [vmem:[%s7] sm:$0x3]
    %v2507 = vlaneseq
    %v2508 = vshrl.u32 %v2507, 7
    %v2509 = vsub.s32 0, %v2508
    %v2510 = vrot.slane %v2505, %v2509
    %v2511 = vlaneseq
    %v2512 = vshrl.u32 %v2511, 7
    %v2513 = vsub.s32 1, %v2512
    %v2514 = vrot.slane %v2505, %v2513
    %v2517 = vmul.f32 %v2501, %v2510
    %v2518 = vmul.f32 %v2502, %v2514
    %v2519 = vmul.f32 %v2503, %v2510
    %v2520 = vmul.f32 %v2504, %v2514
    %v2521 = vadd.f32 %v2517, %v2518
    %2522 = vadd.xlane.f32.xlu0 %v2521
    %v2523 = vpop.xlane.xlu0 %2522
    %v2524 = vadd.f32 %v2519, %v2520
    %2525 = vadd.xlane.f32.xlu0 %v2524
    %v2526 = vpop.xlane.xlu0 %2525
    %v2527 = vld [vmem:[#allocation2] sm:$0x1]
    %v2529 = vlaneseq
    %v2530 = vshrl.u32 %v2529, 7
    %v2531 = vsub.s32 0, %v2530
    %v2532 = vrot.slane %v2527, %v2531
    %v2534 = vadd.f32 %v2523, %v2532
    %v2535 = vadd.f32 %v2526, %v2532
    %vm2536 = vcmask 7168
    %v2537 = vsel %vm2536, %v2534, -inf
    %v2538 = vrot.slane %v2537, 4
    %v2539 = vmax.f32 %v2537, %v2538
    %v2540 = vrot.slane %v2539, 2
    %v2541 = vmax.f32 %v2539, %v2540
    %v2542 = vrot.slane %v2541, 1
    %v2543 = vmax.f32 %v2541, %v2542
    %v2544 = vsel %vm2536, %v2535, -inf
    %v2545 = vrot.slane %v2544, 4
    %v2546 = vmax.f32 %v2544, %v2545
    %v2547 = vrot.slane %v2546, 2
    %v2548 = vmax.f32 %v2546, %v2547
    %v2549 = vrot.slane %v2548, 1
    %v2550 = vmax.f32 %v2548, %v2549
    %v2551 = vsub.f32 %v2534, %v2543
    %v2552 = vsub.f32 %v2535, %v2550
    %v2553 = vmul.f32 %v2551, 1.442695
    %v2554 = vpow.pop %v2553
    %v2555 = vmul.f32 %v2552, 1.442695
    %v2556 = vpow.pop %v2555
    %v2557 = vsel %vm2536, %v2554, 0.0
    %v2558 = vrot.slane %v2557, 4
    %v2559 = vadd.f32 %v2557, %v2558
    %v2560 = vrot.slane %v2559, 2
    %v2561 = vadd.f32 %v2559, %v2560
    %v2562 = vrot.slane %v2561, 1
    %v2563 = vadd.f32 %v2561, %v2562
    %v2564 = vsel %vm2536, %v2556, 0.0
    %v2565 = vrot.slane %v2564, 4
    %v2566 = vadd.f32 %v2564, %v2565
    %v2567 = vrot.slane %v2566, 2
    %v2568 = vadd.f32 %v2566, %v2567
    %v2569 = vrot.slane %v2568, 1
    %v2570 = vadd.f32 %v2568, %v2569
    %v2571 = vrcp.pop %v2563
    %v2572 = vrcp.pop %v2570
    %v2573 = vmul.f32 %v2554, %v2571
    %v2574 = vmul.f32 %v2556, %v2572
    %2576 = vset.pattern.permute.xlu0 0
    %2577 = vperm.xlu0 %2576, %v2573
    %v2578 = vpop.permute.xlu0 %2577
    %2581 = vset.pattern.permute.xlu0 0
    %2582 = vperm.xlu0 %2581, %v2574
    %v2583 = vpop.permute.xlu0 %2582
    %v2585 = vmul.f32 %v2578, %v1969
    %v2586 = vmul.f32 %v2578, %v1971
    %v2587 = vmul.f32 %v2583, %v1973
    %v2588 = vmul.f32 %v2583, %v1975
    %v2589 = vrot.slane %v2585, 4
    %v2590 = vadd.f32 %v2585, %v2589
    %v2591 = vrot.slane %v2590, 2
    %v2592 = vadd.f32 %v2590, %v2591
    %v2593 = vrot.slane %v2592, 1
    %v2594 = vadd.f32 %v2592, %v2593
    %v2595 = vrot.slane %v2586, 4
    %v2596 = vadd.f32 %v2586, %v2595
    %v2597 = vrot.slane %v2596, 2
    %v2598 = vadd.f32 %v2596, %v2597
    %v2599 = vrot.slane %v2598, 1
    %v2600 = vadd.f32 %v2598, %v2599
    %v2601 = vrot.slane %v2587, 4
    %v2602 = vadd.f32 %v2587, %v2601
    %v2603 = vrot.slane %v2602, 2
    %v2604 = vadd.f32 %v2602, %v2603
    %v2605 = vrot.slane %v2604, 1
    %v2606 = vadd.f32 %v2604, %v2605
    %v2607 = vrot.slane %v2588, 4
    %v2608 = vadd.f32 %v2588, %v2607
    %v2609 = vrot.slane %v2608, 2
    %v2610 = vadd.f32 %v2608, %v2609
    %v2611 = vrot.slane %v2610, 1
    %v2612 = vadd.f32 %v2610, %v2611
    %v2617 = vcombine.low %v2594, %v2600
    %v2619 = vunpack.c.l.s4 1983009808
    %v2620 = vunpack.c.0.s8 %v2619
    %v2621 = vlaneseq
    %v2622 = vshrl.u32 %v2621, 7
    %v2623 = vsub.s32 %v2620, %v2622
    %v2624 = vrot.slane %v2617, %v2623
    %v2625 = vcombine.low %v2606, %v2612
    %v2627 = vunpack.c.l.s4 1983009808
    %v2628 = vunpack.c.0.s8 %v2627
    %v2629 = vlaneseq
    %v2630 = vshrl.u32 %v2629, 7
    %v2631 = vsub.s32 %v2628, %v2630
    %v2632 = vrot.slane %v2625, %v2631
    %vm2633 = vcmask 1044484
    %v2634 = vsel %vm2633, %v2624, %v2624
    %vm2635 = vcmask 1046534
    %v2636 = vsel %vm2635, %v2624, %v2634
    %v2637 = vrot.slane %v2632, 7
    %vm2638 = vcmask 1041409
    %v2639 = vsel %vm2638, %v2637, %v2636
    %vm2640 = vcmask 1043459
    %v2641 = vsel %vm2640, %v2637, %v2639
    %vm2642 = vcmask 1045509
    %v2643 = vsel %vm2642, %v2637, %v2641
    %vm2644 = vcmask 1047559
    %v2645 = vsel %vm2644, %v2637, %v2643
    %2647 = vst [vmem:[%s9] sm:$0xf] %v2645
    %2648 = vst [vmem:[#allocation3] sm:$0x3] 0.0
    %v2649 = vlaneseq
    %v2650 = vand.u32 %v2649, 127
    %v2651 = vlaneseq
    %v2652 = vshrl.u32 %v2651, 7
    %v2653 = vsub.s32 %v2650, %v2652
    %v2654 = vrot.slane %v2578, %v2653
    %v2655 = vlaneseq
    %v2656 = vshrl.u32 %v2655, 7
    %v2657 = vsub.s32 %v2650, %v2656
    %v2658 = vrot.slane %v2583, %v2657
    %v2659 = vsel %vm2638, %v2658, %v2654
    %vm2661 = vcmask 58368
    %2662 = vst.msk [vmem:[#allocation3] sm:$0x3] %vm2661, %v2659
    // Predicated region
    $region38: #{gated_attention_forward.1} parent=1 // pred_check
      _
    $region39: #{gated_attention_forward.1} parent=1 // pred_check_branch
      %2664 = sbr.rel (0) target = $region41
    $region40: #{gated_attention_forward.1} parent=1 // pred_region
      _
    $region41: #{gated_attention_forward.1} parent=1 // pred_fallthru
      _
    // Predicated region
    $region42: #{gated_attention_forward.1} parent=1 // pred_check
      _
    $region43: #{gated_attention_forward.1} parent=1 // pred_check_branch
      %2666 = sbr.rel (0) target = $region45
    $region44: #{gated_attention_forward.1} parent=1 // pred_region
      %s2668 = ssub.s32 32, 32
      %2669 = vsyncadd [#allocation4], %s2668
      %s2671 = sshll.u32 [#allocation3], 4
      %s2672 = int_to_ptr.vmem [resolvable:$true] %s2671
      %2674 = dma.vmem_to_hbm [thread:$0]  %s2672, 32, %s10, [#allocation4]
    $region45: #{gated_attention_forward.1} parent=1 // pred_fallthru
      _
    // Predicated region
    $region46: #{gated_attention_forward.1} parent=1 // pred_check
      _
    $region47: #{gated_attention_forward.1} parent=1 // pred_check_branch
      %2676 = sbr.rel (0) target = $region49
    $region48: #{gated_attention_forward.1} parent=1 // pred_region
      _
    $region49: #{gated_attention_forward.1} parent=1 // pred_fallthru
      _
    // Predicated region
    $region50: #{gated_attention_forward.1} parent=1 // pred_check
      _
    $region51: #{gated_attention_forward.1} parent=1 // pred_check_branch
      %2678 = sbr.rel (0) target = $region53
    $region52: #{gated_attention_forward.1} parent=1 // pred_region
      %2679 = dma.done [#allocation4], 32
    $region53: #{gated_attention_forward.1} parent=1 // pred_fallthru
      _
    %2680 = vsyncpa [#allocation4], 1

</llo_original>
